<compile_context>
chip_gen: v7x
topology: tpu7x:2x2x1
jax: 0.10.0
libtpu: 0.0.40
codegen_flags: <defaults>
</compile_context>

<pallas_src>
import functools

import jax
import jax.numpy as jnp
from jax.experimental import pallas as pl
from jax.experimental.pallas import tpu as pltpu


_LANE = 128      # lane width: class axis padded to a multiple of this
_TB_MAX = 512    # max batch-tile rows (sized for v7x's 32 MiB scoped VMEM)


def _round_up(v, m):
    return (v + m - 1) // m * m


# -----------------------------------------------------------------------------
# Fused two-head kernel body.  grid = (head, batch_tile); every per-head tensor
# is stacked on a leading axis and indexed by the head id; weights ignore the
# batch axis (stay resident across batch tiles).
# -----------------------------------------------------------------------------
def _fused_head_kernel(x_ref, w1_ref, s1_ref, b1_ref, w2_ref, s2_ref, b2_ref,
                       attw_ref, mask_ref, out_ref):
    # fc1 + folded BN1 + ReLU.  w1 is int8; int->bf16 is exact, the per-output-
    # channel dequant scale s1 is folded in after the f32 MXU accumulation.
    h1 = jnp.dot(x_ref[...], w1_ref[...].astype(jnp.bfloat16),
                 preferred_element_type=jnp.float32)
    h1 = jnp.maximum(h1 * s1_ref[...] + b1_ref[...], 0.0)            # (TB,512) f32
    # fc2 + folded BN2 + ReLU
    h2 = jnp.dot(h1.astype(jnp.bfloat16), w2_ref[...].astype(jnp.bfloat16),
                 preferred_element_type=jnp.float32)
    h2 = jnp.maximum(h2 * s2_ref[...] + b2_ref[...], 0.0)            # (TB,256) f32
    # F.linear(h2, att_embedding): embedding arrives pre-transposed (256, Cp)
    logits = jnp.dot(h2.astype(jnp.bfloat16), attw_ref[...],
                     preferred_element_type=jnp.float32)             # (TB,Cp) f32
    logits = logits + mask_ref[...]           # -1e30 on padded class columns
    # log_softmax over the class (lane) axis, f32 throughout
    m = jnp.max(logits, axis=-1, keepdims=True)
    z = logits - m
    lse = jnp.log(jnp.sum(jnp.exp(z), axis=-1, keepdims=True))
    out_ref[...] = z - lse


def _run_fused(x_bf16, hp, c_pad):
    b_pad = x_bf16.shape[0]
    tb = b_pad if b_pad <= _TB_MAX else _TB_MAX
    n_bt = b_pad // tb

    # Advisory cost hint: this call is HBM-bound (weight DMA), let XLA overlap.
    flops = 2 * 2 * b_pad * (1024 * 512 + 512 * 256 + 256 * c_pad)
    bytes_accessed = (2 * b_pad * 1024 * 2          # x (bf16), re-read per head
                      + 2 * 1024 * 512              # w1 int8
                      + 2 * 512 * 256               # w2 int8
                      + 2 * 256 * c_pad * 2         # att embedding bf16
                      + 2 * (512 + 512 + 256 + 256 + c_pad) * 4   # scales/bias/mask
                      + 2 * b_pad * c_pad * 4)      # output f32
    transcendentals = 2 * b_pad * c_pad             # exp in log_softmax

    grid_spec = pltpu.PrefetchScalarGridSpec(
        num_scalar_prefetch=0,
        grid=(2, n_bt),                              # (head, batch tile)
        in_specs=[
            pl.BlockSpec((tb, 1024), lambda h, bt: (bt, 0)),            # x
            pl.BlockSpec((None, 1024, 512), lambda h, bt: (h, 0, 0)),   # w1[h] i8
            pl.BlockSpec((None, 1, 512), lambda h, bt: (h, 0, 0)),      # s1[h]
            pl.BlockSpec((None, 1, 512), lambda h, bt: (h, 0, 0)),      # b1[h]
            pl.BlockSpec((None, 512, 256), lambda h, bt: (h, 0, 0)),    # w2[h] i8
            pl.BlockSpec((None, 1, 256), lambda h, bt: (h, 0, 0)),      # s2[h]
            pl.BlockSpec((None, 1, 256), lambda h, bt: (h, 0, 0)),      # b2[h]
            pl.BlockSpec((None, 256, c_pad), lambda h, bt: (h, 0, 0)),  # att emb^T
            pl.BlockSpec((None, 1, c_pad), lambda h, bt: (h, 0, 0)),    # pad mask
        ],
        out_specs=pl.BlockSpec((None, tb, c_pad), lambda h, bt: (h, bt, 0)),
    )
    return pl.pallas_call(
        _fused_head_kernel,
        out_shape=jax.ShapeDtypeStruct((2, b_pad, c_pad), jnp.float32),
        grid_spec=grid_spec,
        compiler_params=pltpu.CompilerParams(
            dimension_semantics=("parallel", "parallel"),  # v7x: one head per TC
            vmem_limit_bytes=32 * 1024 * 1024),
        cost_estimate=pl.CostEstimate(
            flops=flops,
            transcendentals=transcendentals,
            bytes_accessed=bytes_accessed),
    )(x_bf16, hp["w1"], hp["s1"], hp["b1"], hp["w2"], hp["s2"], hp["b2"],
      hp["attw_T"], hp["mask"])


# -----------------------------------------------------------------------------
# Parameter construction (eval-mode BN folded into the linear layers).
# -----------------------------------------------------------------------------
def _fold_bn(w_in_out, b, gamma, beta, mean, var, eps=1e-5):
    a = gamma / jnp.sqrt(var + eps)
    w_f = w_in_out * a[None, :]
    b_f = b * a + (beta - mean * a)
    return w_f.astype(jnp.float32), b_f.reshape(1, -1).astype(jnp.float32)


def _quantize_int8(w):
    """Per-output-channel symmetric int8 weight quantization."""
    amax = jnp.max(jnp.abs(w), axis=0, keepdims=True)          # (1, out)
    scale = jnp.maximum(amax, 1e-8) / 127.0
    w_i8 = jnp.clip(jnp.round(w / scale), -127, 127).astype(jnp.int8)
    return w_i8, scale.astype(jnp.float32)


def _xavier(key, shape):
    fan_in, fan_out = shape
    bound = jnp.sqrt(6.0 / (fan_in + fan_out))
    return jax.random.uniform(key, shape, jnp.float32, -bound, bound)


def init_params(key, att_size=300):
    """Synthetic parameters matching the module's shapes, stacked per head.

    Returns a dict with (BN already folded into fc1/fc2):
      w1: (2, 1024, 512) f32   b1: (2, 1, 512) f32
      w2: (2,  512, 256) f32   b2: (2, 1, 256) f32
      wa: (2, att_size, 256) f32  ba: (2, 1, 256) f32  (attention Linear)
    """
    ks = jax.random.split(key, 8)
    w1s, b1s, w2s, b2s = [], [], [], []
    for head_idx in range(2):
        k0, k1, k2 = jax.random.split(ks[head_idx], 3)
        w1 = _xavier(k0, (1024, 512))
        b1 = jnp.zeros((512,), jnp.float32)
        w2 = _xavier(k1, (512, 256))
        b2 = jnp.zeros((256,), jnp.float32)
        # eval-mode BatchNorm running stats / affine
        g1 = 1.0 + 0.1 * jax.random.normal(jax.random.fold_in(k2, 0), (512,))
        be1 = 0.1 * jax.random.normal(jax.random.fold_in(k2, 1), (512,))
        m1 = 0.05 * jax.random.normal(jax.random.fold_in(k2, 2), (512,))
        v1 = jnp.abs(1.0 + 0.1 * jax.random.normal(jax.random.fold_in(k2, 3), (512,)))
        g2 = 1.0 + 0.1 * jax.random.normal(jax.random.fold_in(k2, 4), (256,))
        be2 = 0.1 * jax.random.normal(jax.random.fold_in(k2, 5), (256,))
        m2 = 0.05 * jax.random.normal(jax.random.fold_in(k2, 6), (256,))
        v2 = jnp.abs(1.0 + 0.1 * jax.random.normal(jax.random.fold_in(k2, 7), (256,)))
        w1f, b1f = _fold_bn(w1, b1, g1, be1, m1, v1)
        w2f, b2f = _fold_bn(w2, b2, g2, be2, m2, v2)
        w1s.append(w1f); b1s.append(b1f); w2s.append(w2f); b2s.append(b2f)
    return {
        "w1": jnp.stack(w1s),
        "b1": jnp.stack(b1s),
        "w2": jnp.stack(w2s),
        "b2": jnp.stack(b2s),
        "wa": jnp.stack([_xavier(ks[4], (att_size, 256)),
                         _xavier(ks[5], (att_size, 256))]),
        "ba": jnp.zeros((2, 1, 256), jnp.float32),
    }


# -----------------------------------------------------------------------------
# One-time packing of everything that does NOT depend on x (hoisted out of the
# per-forward path): int8 weight packing, attention embeddings, pad mask.
# -----------------------------------------------------------------------------
def prepare_head_inputs(params, old_att, new_att):
    hp_prec = jax.lax.Precision.HIGHEST
    n_old = int(old_att.shape[0])
    n_new = int(new_att.shape[0])
    c_pad = max(_LANE, _round_up(max(n_old, n_new), _LANE))

    # Attention-embedding branch is x-independent; pre-transpose to a
    # lane-dense (256, C_pad) bf16 slab per head.
    def att_embed(att, wa, ba, n):
        e = jnp.maximum(jnp.dot(att, wa, precision=hp_prec) + ba, 0.0)   # (C,256)
        return jnp.pad(e.T, ((0, 0), (0, c_pad - n)))                    # (256,Cp)

    attw_T = jnp.stack([
        att_embed(old_att, params["wa"][0], params["ba"][0], n_old),
        att_embed(new_att, params["wa"][1], params["ba"][1], n_new),
    ]).astype(jnp.bfloat16)                                              # (2,256,Cp)

    lane = jnp.arange(c_pad)
    mask = jnp.stack([
        jnp.where(lane < n_old, 0.0, -1e30),
        jnp.where(lane < n_new, 0.0, -1e30),
    ]).reshape(2, 1, c_pad).astype(jnp.float32)                          # (2,1,Cp)

    # Weight-only int8 packing (per-output-channel scales).
    w1_i8, s1 = [], []
    w2_i8, s2 = [], []
    for h in range(2):
        wi, si = _quantize_int8(params["w1"][h]); w1_i8.append(wi); s1.append(si)
        wi, si = _quantize_int8(params["w2"][h]); w2_i8.append(wi); s2.append(si)

    head_inputs = {
        "w1": jnp.stack(w1_i8),                      # (2,1024,512) int8
        "s1": jnp.stack(s1),                         # (2,1,512) f32
        "b1": params["b1"],                          # (2,1,512) f32
        "w2": jnp.stack(w2_i8),                      # (2,512,256) int8
        "s2": jnp.stack(s2),                         # (2,1,256) f32
        "b2": params["b2"],                          # (2,1,256) f32
        "attw_T": attw_T,                            # (2,256,Cp) bf16
        "mask": mask,                                # (2,1,Cp) f32
    }
    return head_inputs, n_old, n_new, c_pad


# -----------------------------------------------------------------------------
# Forward wrapper: just a bf16 cast of x (+ optional batch padding) and the
# fused pallas_call.
# -----------------------------------------------------------------------------
@functools.partial(jax.jit, static_argnames=("n_old", "n_new", "c_pad"))
def point_conv_lwf_forward(x, head_inputs, n_old, n_new, c_pad):
    """x: (B, 1024) pooled l3 feature (stand-in for sa1/sa2/sa3 output)."""
    b = x.shape[0]
    b_pad = b if b <= _TB_MAX else _round_up(b, _TB_MAX)
    x_bf = x.astype(jnp.bfloat16)
    if b_pad != b:
        x_bf = jnp.pad(x_bf, ((0, b_pad - b), (0, 0)))
    out = _run_fused(x_bf, head_inputs, c_pad)       # (2, B_pad, Cp) f32
    log_old = out[0, :b, :n_old]
    log_new = out[1, :b, :n_new]
    return log_old, log_new, x                       # feat = pooled x


# -----------------------------------------------------------------------------
# Pure-JAX reference (same int8/bf16-quantized weights) for correctness check.
# -----------------------------------------------------------------------------
def _reference(x, old_att, new_att, params):
    hp = jax.lax.Precision.HIGHEST
    outs = []
    xb = x.astype(jnp.bfloat16).astype(jnp.float32)
    for h, att in ((0, old_att), (1, new_att)):
        w1_i8, s1 = _quantize_int8(params["w1"][h])
        w2_i8, s2 = _quantize_int8(params["w2"][h])
        h1 = jnp.dot(xb, w1_i8.astype(jnp.float32), precision=hp) * s1 + params["b1"][h]
        h1 = jnp.maximum(h1, 0.0)
        h1b = h1.astype(jnp.bfloat16).astype(jnp.float32)
        h2 = jnp.dot(h1b, w2_i8.astype(jnp.float32), precision=hp) * s2 + params["b2"][h]
        h2 = jnp.maximum(h2, 0.0)
        attw = jnp.maximum(jnp.dot(att, params["wa"][h], precision=hp)
                           + params["ba"][h], 0.0)
        attw_b = attw.astype(jnp.bfloat16).astype(jnp.float32)
        h2b = h2.astype(jnp.bfloat16).astype(jnp.float32)
        logits = jnp.dot(h2b, attw_b.T, precision=hp)
        outs.append(jax.nn.log_softmax(logits, axis=-1))
    return outs[0], outs[1]


if __name__ == "__main__":
    key = jax.random.PRNGKey(0)
    k_param, k_x, k_oa, k_na = jax.random.split(key, 4)

    B, att_size, n_old, n_new = 2, 300, 10, 6
    params = init_params(k_param, att_size=att_size)

    # x stands in for l3_points.view(B, 1024)
    x = jax.random.normal(k_x, (B, 1024), jnp.float32)
    old_att_mat = jax.random.normal(k_oa, (n_old, att_size), jnp.float32)
    new_att_mat = jax.random.normal(k_na, (n_new, att_size), jnp.float32)

    # One-time (x-independent) packing, hoisted out of the per-call path.
    head_inputs, n_old_c, n_new_c, c_pad = prepare_head_inputs(
        params, old_att_mat, new_att_mat)
    head_inputs = jax.block_until_ready(head_inputs)

    log_old, log_new, feat = point_conv_lwf_forward(
        x, head_inputs, n_old_c, n_new_c, c_pad)
    jax.block_until_ready((log_old, log_new, feat))

    assert log_old.shape == (B, n_old)
    assert log_new.shape == (B, n_new)
    assert feat.shape == (B, 1024)

    # log_softmax rows exponentiate-sum to 1 (normalization is done in f32)
    assert jnp.allclose(jnp.sum(jnp.exp(log_old), axis=-1), 1.0, atol=1e-4)
    assert jnp.allclose(jnp.sum(jnp.exp(log_new), axis=-1), 1.0, atol=1e-4)

    # Compare against a pure-JAX reference using the same quantized weights.
    ref_old, ref_new = _reference(x, old_att_mat, new_att_mat, params)
    assert jnp.allclose(log_old, ref_old, atol=1e-2, rtol=1e-2)
    assert jnp.allclose(log_new, ref_new, atol=1e-2, rtol=1e-2)

    print("KERNEL_OK")
</pallas_src>

<mosaic_0001>
module attributes {stable_mosaic.version = 11 : i64} {
  func.func @_fused_head_kernel(%arg0: i32, %arg1: i32, %arg2: memref<2x1024xbf16, #tpu.memory_space<vmem>>, %arg3: memref<1x1024x512xi8, #tpu.memory_space<vmem>>, %arg4: memref<1x1x512xf32, #tpu.memory_space<vmem>>, %arg5: memref<1x1x512xf32, #tpu.memory_space<vmem>>, %arg6: memref<1x512x256xi8, #tpu.memory_space<vmem>>, %arg7: memref<1x1x256xf32, #tpu.memory_space<vmem>>, %arg8: memref<1x1x256xf32, #tpu.memory_space<vmem>>, %arg9: memref<1x256x128xbf16, #tpu.memory_space<vmem>>, %arg10: memref<1x1x128xf32, #tpu.memory_space<vmem>>, %arg11: memref<1x2x128xf32, #tpu.memory_space<vmem>>) attributes {dimension_semantics = [#tpu.dimension_semantics<parallel>, #tpu.dimension_semantics<parallel>], iteration_bounds = array<i64: 2, 1>, scalar_prefetch = 0 : i64, scratch_operands = 0 : i64, tpu.core_type = #tpu.core_type<tc>, window_params = [{transform_indices = @transform_0, window_bounds = array<i64: 2, 1024>}, {transform_indices = @transform_1, window_bounds = array<i64: 1, 1024, 512>}, {transform_indices = @transform_2, window_bounds = array<i64: 1, 1, 512>}, {transform_indices = @transform_3, window_bounds = array<i64: 1, 1, 512>}, {transform_indices = @transform_4, window_bounds = array<i64: 1, 512, 256>}, {transform_indices = @transform_5, window_bounds = array<i64: 1, 1, 256>}, {transform_indices = @transform_6, window_bounds = array<i64: 1, 1, 256>}, {transform_indices = @transform_7, window_bounds = array<i64: 1, 256, 128>}, {transform_indices = @transform_8, window_bounds = array<i64: 1, 1, 128>}, {transform_indices = @transform_9, window_bounds = array<i64: 1, 2, 128>}]} {
    %c0 = arith.constant 0 : index
    %c0_0 = arith.constant 0 : index
    %0 = vector.load %arg2[%c0, %c0_0] : memref<2x1024xbf16, #tpu.memory_space<vmem>>, vector<2x1024xbf16>
    %c0_1 = arith.constant 0 : index
    %c0_2 = arith.constant 0 : index
    %c0_3 = arith.constant 0 : index
    %1 = vector.load %arg3[%c0_1, %c0_2, %c0_3] : memref<1x1024x512xi8, #tpu.memory_space<vmem>>, vector<1x1024x512xi8>
    %2 = vector.shape_cast %1 : vector<1x1024x512xi8> to vector<1024x512xi8>
    %3 = arith.sitofp %2 : vector<1024x512xi8> to vector<1024x512xbf16>
    %cst = arith.constant dense<0.000000e+00> : vector<2x512xf32>
    %4 = tpu.matmul %0, %3, %cst {dimension_numbers = #tpu.dot_dimension_numbers<[1], [0], [0], [1], [0, 0, 1, 1], [], []>} : vector<2x1024xbf16>, vector<1024x512xbf16>, vector<2x512xf32> -> vector<2x512xf32>
    %c0_4 = arith.constant 0 : index
    %c0_5 = arith.constant 0 : index
    %c0_6 = arith.constant 0 : index
    %5 = vector.load %arg4[%c0_4, %c0_5, %c0_6] : memref<1x1x512xf32, #tpu.memory_space<vmem>>, vector<1x1x512xf32>
    %6 = vector.shape_cast %5 : vector<1x1x512xf32> to vector<1x512xf32>
    %7 = vector.broadcast %6 : vector<1x512xf32> to vector<2x512xf32>
    %8 = arith.mulf %4, %7 : vector<2x512xf32>
    %c0_7 = arith.constant 0 : index
    %c0_8 = arith.constant 0 : index
    %c0_9 = arith.constant 0 : index
    %9 = vector.load %arg5[%c0_7, %c0_8, %c0_9] : memref<1x1x512xf32, #tpu.memory_space<vmem>>, vector<1x1x512xf32>
    %10 = vector.shape_cast %9 : vector<1x1x512xf32> to vector<1x512xf32>
    %11 = vector.broadcast %10 : vector<1x512xf32> to vector<2x512xf32>
    %12 = arith.addf %8, %11 : vector<2x512xf32>
    %cst_10 = arith.constant 0.000000e+00 : f32
    %13 = vector.broadcast %cst_10 : f32 to vector<2x512xf32>
    %14 = arith.maximumf %12, %13 : vector<2x512xf32>
    %15 = arith.truncf %14 : vector<2x512xf32> to vector<2x512xbf16>
    %c0_11 = arith.constant 0 : index
    %c0_12 = arith.constant 0 : index
    %c0_13 = arith.constant 0 : index
    %16 = vector.load %arg6[%c0_11, %c0_12, %c0_13] : memref<1x512x256xi8, #tpu.memory_space<vmem>>, vector<1x512x256xi8>
    %17 = vector.shape_cast %16 : vector<1x512x256xi8> to vector<512x256xi8>
    %18 = arith.sitofp %17 : vector<512x256xi8> to vector<512x256xbf16>
    %cst_14 = arith.constant dense<0.000000e+00> : vector<2x256xf32>
    %19 = tpu.matmul %15, %18, %cst_14 {dimension_numbers = #tpu.dot_dimension_numbers<[1], [0], [0], [1], [0, 0, 1, 1], [], []>} : vector<2x512xbf16>, vector<512x256xbf16>, vector<2x256xf32> -> vector<2x256xf32>
    %c0_15 = arith.constant 0 : index
    %c0_16 = arith.constant 0 : index
    %c0_17 = arith.constant 0 : index
    %20 = vector.load %arg7[%c0_15, %c0_16, %c0_17] : memref<1x1x256xf32, #tpu.memory_space<vmem>>, vector<1x1x256xf32>
    %21 = vector.shape_cast %20 : vector<1x1x256xf32> to vector<1x256xf32>
    %22 = vector.broadcast %21 : vector<1x256xf32> to vector<2x256xf32>
    %23 = arith.mulf %19, %22 : vector<2x256xf32>
    %c0_18 = arith.constant 0 : index
    %c0_19 = arith.constant 0 : index
    %c0_20 = arith.constant 0 : index
    %24 = vector.load %arg8[%c0_18, %c0_19, %c0_20] : memref<1x1x256xf32, #tpu.memory_space<vmem>>, vector<1x1x256xf32>
    %25 = vector.shape_cast %24 : vector<1x1x256xf32> to vector<1x256xf32>
    %26 = vector.broadcast %25 : vector<1x256xf32> to vector<2x256xf32>
    %27 = arith.addf %23, %26 : vector<2x256xf32>
    %cst_21 = arith.constant 0.000000e+00 : f32
    %28 = vector.broadcast %cst_21 : f32 to vector<2x256xf32>
    %29 = arith.maximumf %27, %28 : vector<2x256xf32>
    %30 = arith.truncf %29 : vector<2x256xf32> to vector<2x256xbf16>
    %c0_22 = arith.constant 0 : index
    %c0_23 = arith.constant 0 : index
    %c0_24 = arith.constant 0 : index
    %31 = vector.load %arg9[%c0_22, %c0_23, %c0_24] : memref<1x256x128xbf16, #tpu.memory_space<vmem>>, vector<1x256x128xbf16>
    %32 = vector.shape_cast %31 : vector<1x256x128xbf16> to vector<256x128xbf16>
    %cst_25 = arith.constant dense<0.000000e+00> : vector<2x128xf32>
    %33 = tpu.matmul %30, %32, %cst_25 {dimension_numbers = #tpu.dot_dimension_numbers<[1], [0], [0], [1], [0, 0, 1, 1], [], []>} : vector<2x256xbf16>, vector<256x128xbf16>, vector<2x128xf32> -> vector<2x128xf32>
    %c0_26 = arith.constant 0 : index
    %c0_27 = arith.constant 0 : index
    %c0_28 = arith.constant 0 : index
    %34 = vector.load %arg10[%c0_26, %c0_27, %c0_28] : memref<1x1x128xf32, #tpu.memory_space<vmem>>, vector<1x1x128xf32>
    %35 = vector.shape_cast %34 : vector<1x1x128xf32> to vector<1x128xf32>
    %36 = vector.broadcast %35 : vector<1x128xf32> to vector<2x128xf32>
    %37 = arith.addf %33, %36 : vector<2x128xf32>
    %cst_29 = arith.constant dense<0xFF800000> : vector<2xf32>
    %38 = vector.multi_reduction <maximumf>, %37, %cst_29 [1] : vector<2x128xf32> to vector<2xf32>
    %39 = vector.shape_cast %38 : vector<2xf32> to vector<2x1xf32>
    %40 = vector.broadcast %39 : vector<2x1xf32> to vector<2x128xf32>
    %41 = arith.subf %37, %40 : vector<2x128xf32>
    %42 = math.exp %41 : vector<2x128xf32>
    %cst_30 = arith.constant dense<0.000000e+00> : vector<2xf32>
    %43 = vector.multi_reduction <add>, %42, %cst_30 [1] : vector<2x128xf32> to vector<2xf32>
    %44 = vector.shape_cast %43 : vector<2xf32> to vector<2x1xf32>
    %45 = math.log %44 : vector<2x1xf32>
    %46 = vector.broadcast %45 : vector<2x1xf32> to vector<2x128xf32>
    %47 = arith.subf %41, %46 : vector<2x128xf32>
    %c0_31 = arith.constant 0 : index
    %c0_32 = arith.constant 0 : index
    %c0_33 = arith.constant 0 : index
    %48 = vector.load %arg11[%c0_31, %c0_32, %c0_33] : memref<1x2x128xf32, #tpu.memory_space<vmem>>, vector<1x2x128xf32>
    %49 = vector.shape_cast %48 : vector<1x2x128xf32> to vector<2x128xf32>
    %50 = vector.shape_cast %47 : vector<2x128xf32> to vector<1x2x128xf32>
    tpu.vector_store %arg11[%c0_31, %c0_32, %c0_33], %50 {strides = array<i32>} : memref<1x2x128xf32, #tpu.memory_space<vmem>>, vector<1x2x128xf32>,
    return
  }
  func.func @transform_0(%arg0: i32, %arg1: i32) -> (i32, i32) {
    %c0_i32 = arith.constant 0 : i32
    %c0_i32_0 = arith.constant 0 : i32
    return %arg1, %c0_i32 : i32, i32
  }
  func.func @transform_1(%arg0: i32, %arg1: i32) -> (i32, i32, i32) {
    %c0_i32 = arith.constant 0 : i32
    %c0_i32_0 = arith.constant 0 : i32
    %c0_i32_1 = arith.constant 0 : i32
    return %arg0, %c0_i32, %c0_i32_0 : i32, i32, i32
  }
  func.func @transform_2(%arg0: i32, %arg1: i32) -> (i32, i32, i32) {
    %c0_i32 = arith.constant 0 : i32
    %c0_i32_0 = arith.constant 0 : i32
    %c0_i32_1 = arith.constant 0 : i32
    return %arg0, %c0_i32, %c0_i32_0 : i32, i32, i32
  }
  func.func @transform_3(%arg0: i32, %arg1: i32) -> (i32, i32, i32) {
    %c0_i32 = arith.constant 0 : i32
    %c0_i32_0 = arith.constant 0 : i32
    %c0_i32_1 = arith.constant 0 : i32
    return %arg0, %c0_i32, %c0_i32_0 : i32, i32, i32
  }
  func.func @transform_4(%arg0: i32, %arg1: i32) -> (i32, i32, i32) {
    %c0_i32 = arith.constant 0 : i32
    %c0_i32_0 = arith.constant 0 : i32
    %c0_i32_1 = arith.constant 0 : i32
    return %arg0, %c0_i32, %c0_i32_0 : i32, i32, i32
  }
  func.func @transform_5(%arg0: i32, %arg1: i32) -> (i32, i32, i32) {
    %c0_i32 = arith.constant 0 : i32
    %c0_i32_0 = arith.constant 0 : i32
    %c0_i32_1 = arith.constant 0 : i32
    return %arg0, %c0_i32, %c0_i32_0 : i32, i32, i32
  }
  func.func @transform_6(%arg0: i32, %arg1: i32) -> (i32, i32, i32) {
    %c0_i32 = arith.constant 0 : i32
    %c0_i32_0 = arith.constant 0 : i32
    %c0_i32_1 = arith.constant 0 : i32
    return %arg0, %c0_i32, %c0_i32_0 : i32, i32, i32
  }
  func.func @transform_7(%arg0: i32, %arg1: i32) -> (i32, i32, i32) {
    %c0_i32 = arith.constant 0 : i32
    %c0_i32_0 = arith.constant 0 : i32
    %c0_i32_1 = arith.constant 0 : i32
    return %arg0, %c0_i32, %c0_i32_0 : i32, i32, i32
  }
  func.func @transform_8(%arg0: i32, %arg1: i32) -> (i32, i32, i32) {
    %c0_i32 = arith.constant 0 : i32
    %c0_i32_0 = arith.constant 0 : i32
    %c0_i32_1 = arith.constant 0 : i32
    return %arg0, %c0_i32, %c0_i32_0 : i32, i32, i32
  }
  func.func @transform_9(%arg0: i32, %arg1: i32) -> (i32, i32, i32) {
    %c0_i32 = arith.constant 0 : i32
    %c0_i32_0 = arith.constant 0 : i32
    return %arg0, %arg1, %c0_i32 : i32, i32, i32
  }
}

</mosaic_0001>

<llo_original>
// kernel: point_conv_lwf_forward.1
$region0: #{point_conv_lwf_forward.1}
  #allocation0 [shape = 'u32[]', space=smem, size = 0x4, offset = 0x4, fixed_abs, tag = 'smem constant byte address 0x4 - core index']
  #allocation1 [shape = 'u32[144,128]{1,0:T(1,128)}', space=vmem, size = 0x12000, scoped, tag = 'internal scratch']
  %s0 = inlined_call_operand.vmem [shape: bf16[2,1024], index: 0, kind: input, shape index: {}]
  %s1 = inlined_call_operand.hbm [shape: s8[2,1024,512], index: 1, kind: input, shape index: {}]
  %s2 = inlined_call_operand.vmem [shape: f32[2,1,512], index: 2, kind: input, shape index: {}]
  %s3 = inlined_call_operand.vmem [shape: f32[2,1,512], index: 3, kind: input, shape index: {}]
  %s4 = inlined_call_operand.hbm [shape: s8[2,512,256], index: 4, kind: input, shape index: {}]
  %s5 = inlined_call_operand.vmem [shape: f32[2,1,256], index: 5, kind: input, shape index: {}]
  %s6 = inlined_call_operand.vmem [shape: f32[2,1,256], index: 6, kind: input, shape index: {}]
  %s7 = inlined_call_operand.hbm [shape: bf16[2,256,128], index: 7, kind: input, shape index: {}]
  %s8 = inlined_call_operand.vmem [shape: f32[2,1,128], index: 8, kind: input, shape index: {}]
  %s9 = inlined_call_operand.vmem [shape: f32[2,2,128], index: 9, kind: output, shape index: {}]
  %s10 = sld [smem:[#allocation0]]
  $region81: #{point_conv_lwf_forward.1} parent=0
    _
  %s12 = ssub.s32 1, %s10
  %s13 = scalar_select 0, %s12, %s10
  $region1: #{point_conv_lwf_forward.1} parent=0
    #allocation2 [shape = 'u8[1048576]{0}', space=vmem, size = 0x100000, scoped, tag = 'input window, operand 1']
    #allocation3 [shape = 's32[2]{0}', space=sflag, size = 0x8, scoped, tag = 'scoped memory for point_conv_lwf_forward.1']
    #allocation4 [shape = 'u8[262144]{0}', space=vmem, size = 0x40000, scoped, tag = 'input window, operand 4']
    #allocation5 [shape = 's32[2]{0}', space=sflag, size = 0x8, scoped, tag = 'scoped memory for point_conv_lwf_forward.1']
    #allocation6 [shape = 'u8[131072]{0}', space=vmem, size = 0x20000, scoped, tag = 'input window, operand 7']
    %14 = vsyncpa [#allocation3], 0
    %s15 = scalar_lea.sflag [#allocation3], 1
    %16 = vsyncpa %s15, 0
    %17 = vsyncpa [#allocation5], 0
    %s18 = scalar_lea.sflag [#allocation5], 1
    %19 = vsyncpa %s18, 0
    loop: start=0, step=1, limit=4
    $region2: #{point_conv_lwf_forward.1} parent=1 // loop_pre_header
      _
    $region3: #{point_conv_lwf_forward.1} parent=1 // loop_header
      %s21 = sphi 0, %s25
      %p22 = scmp.ge.s32.totalorder %s21, 4
      %s28 = sphi 0, %s40
      %s29 = sphi 0, %s36
      %s30 = sphi 0, %s28
      %s31 = sphi 0, %s29
      %s32 = sphi 0, %s30
      %s33 = sphi 0, %s31
      %s43 = sphi 0, %s45
      %s46 = sphi 0, %s43
      %s47 = sphi 0, %s46
      %s63 = sphi 0, %s47
      %s69 = sphi 0, %s71
      %s72 = sphi 0, %s69
      %s73 = sphi 0, %s72
      %s89 = sphi 0, %s73
      %s95 = sphi 0, %s97
      %s98 = sphi 0, %s95
      %s99 = sphi 0, %s98
      %s115 = sphi 0, %s99
      %s121 = sphi 0, %s123
      %s124 = sphi 0, %s121
      %s125 = sphi 0, %s124
      %s141 = sphi 0, %s125
      %s147 = sphi 0, %s149
      %s150 = sphi 0, %s147
      %s151 = sphi 0, %s150
      %s167 = sphi 0, %s151
      %s173 = sphi 0, %s175
      %s176 = sphi 0, %s173
      %s177 = sphi 0, %s176
      %s193 = sphi 0, %s177
      %s199 = sphi 0, %s201
      %s202 = sphi 0, %s199
      %s203 = sphi 0, %s202
      %s219 = sphi 0, %s203
      %s225 = sphi 0, %s227
      %s228 = sphi 0, %s225
      %s229 = sphi 0, %s228
      %s245 = sphi 0, %s229
      %s251 = sphi 0, %s253
      %s254 = sphi 0, %s251
      %s255 = sphi 0, %s254
      %s271 = sphi 0, %s255
      %s279 = sphi 0, %s281
      %s282 = sphi 0, %s279
      %s283 = sphi 0, %s282
      %s299 = sphi 0, %s283
    $region4: #{point_conv_lwf_forward.1} parent=1 // loop_header_branch
      %24 = sbr.rel (%p22) target = $region8
    $region5: #{point_conv_lwf_forward.1} parent=1 // loop_body
      %s26 = ssub.s32 %s21, 1
      %s27 = ssub.s32 %s21, 2
      %s34 = sadd.s32 1, %s29
      %p35 = scmp.ge.s32.totalorder %s34, 1
      %s36 = scalar_select %p35, 0, %s34
      %s37 = sadd.s32 1, %s28
      %s38 = scalar_select %p35, %s37, %s28
      %p39 = scmp.ge.s32.totalorder %s38, 2
      %s40 = scalar_select %p39, 0, %s38
      %s41 = ssub.s32 %s29, %s36
      %p42 = scmp.eq.s32.totalorder %s41, 0
      %s44 = sadd.s32 %s43, 1
      %s45 = scalar_select %p42, %s43, %s44
      %p48 = pneg %p42
      %p49 = scmp.eq.s32.totalorder %s21, 1
      %p50 = por %p48, %p49
      %p51 = scmp.ne.s32.totalorder %s43, %s46
      %p52 = scmp.eq.s32.totalorder %s21, 0
      %p53 = por %p51, %p52
      %p54 = scmp.ne.s32.totalorder %s43, %s46
      %p55 = scmp.eq.s32.totalorder %s26, 1
      %p56 = por %p54, %p55
      %p57 = scmp.ne.s32.totalorder %s46, %s47
      %p58 = scmp.eq.s32.totalorder %s26, 0
      %p59 = por %p57, %p58
      %p60 = scmp.ne.s32.totalorder %s46, %s47
      %p61 = scmp.eq.s32.totalorder %s27, 1
      %p62 = por %p60, %p61
      %p64 = scmp.ne.s32.totalorder %s47, %s63
      %p65 = scmp.eq.s32.totalorder %s27, 0
      %p66 = por %p64, %p65
      %s67 = ssub.s32 %s28, %s40
      %p68 = scmp.eq.s32.totalorder %s67, 0
      %s70 = sadd.s32 %s69, 1
      %s71 = scalar_select %p68, %s69, %s70
      %p74 = pneg %p68
      %p75 = scmp.eq.s32.totalorder %s21, 1
      %p76 = por %p74, %p75
      %p77 = scmp.ne.s32.totalorder %s69, %s72
      %p78 = scmp.eq.s32.totalorder %s21, 0
      %p79 = por %p77, %p78
      %p80 = scmp.ne.s32.totalorder %s69, %s72
      %p81 = scmp.eq.s32.totalorder %s26, 1
      %p82 = por %p80, %p81
      %p83 = scmp.ne.s32.totalorder %s72, %s73
      %p84 = scmp.eq.s32.totalorder %s26, 0
      %p85 = por %p83, %p84
      %p86 = scmp.ne.s32.totalorder %s72, %s73
      %p87 = scmp.eq.s32.totalorder %s27, 1
      %p88 = por %p86, %p87
      %p90 = scmp.ne.s32.totalorder %s73, %s89
      %p91 = scmp.eq.s32.totalorder %s27, 0
      %p92 = por %p90, %p91
      %s93 = ssub.s32 %s28, %s40
      %p94 = scmp.eq.s32.totalorder %s93, 0
      %s96 = sadd.s32 %s95, 1
      %s97 = scalar_select %p94, %s95, %s96
      %p100 = pneg %p94
      %p101 = scmp.eq.s32.totalorder %s21, 1
      %p102 = por %p100, %p101
      %p103 = scmp.ne.s32.totalorder %s95, %s98
      %p104 = scmp.eq.s32.totalorder %s21, 0
      %p105 = por %p103, %p104
      %p106 = scmp.ne.s32.totalorder %s95, %s98
      %p107 = scmp.eq.s32.totalorder %s26, 1
      %p108 = por %p106, %p107
      %p109 = scmp.ne.s32.totalorder %s98, %s99
      %p110 = scmp.eq.s32.totalorder %s26, 0
      %p111 = por %p109, %p110
      %p112 = scmp.ne.s32.totalorder %s98, %s99
      %p113 = scmp.eq.s32.totalorder %s27, 1
      %p114 = por %p112, %p113
      %p116 = scmp.ne.s32.totalorder %s99, %s115
      %p117 = scmp.eq.s32.totalorder %s27, 0
      %p118 = por %p116, %p117
      %s119 = ssub.s32 %s28, %s40
      %p120 = scmp.eq.s32.totalorder %s119, 0
      %s122 = sadd.s32 %s121, 1
      %s123 = scalar_select %p120, %s121, %s122
      %p126 = pneg %p120
      %p127 = scmp.eq.s32.totalorder %s21, 1
      %p128 = por %p126, %p127
      %p129 = scmp.ne.s32.totalorder %s121, %s124
      %p130 = scmp.eq.s32.totalorder %s21, 0
      %p131 = por %p129, %p130
      %p132 = scmp.ne.s32.totalorder %s121, %s124
      %p133 = scmp.eq.s32.totalorder %s26, 1
      %p134 = por %p132, %p133
      %p135 = scmp.ne.s32.totalorder %s124, %s125
      %p136 = scmp.eq.s32.totalorder %s26, 0
      %p137 = por %p135, %p136
      %p138 = scmp.ne.s32.totalorder %s124, %s125
      %p139 = scmp.eq.s32.totalorder %s27, 1
      %p140 = por %p138, %p139
      %p142 = scmp.ne.s32.totalorder %s125, %s141
      %p143 = scmp.eq.s32.totalorder %s27, 0
      %p144 = por %p142, %p143
      %s145 = ssub.s32 %s28, %s40
      %p146 = scmp.eq.s32.totalorder %s145, 0
      %s148 = sadd.s32 %s147, 1
      %s149 = scalar_select %p146, %s147, %s148
      %p152 = pneg %p146
      %p153 = scmp.eq.s32.totalorder %s21, 1
      %p154 = por %p152, %p153
      %p155 = scmp.ne.s32.totalorder %s147, %s150
      %p156 = scmp.eq.s32.totalorder %s21, 0
      %p157 = por %p155, %p156
      %p158 = scmp.ne.s32.totalorder %s147, %s150
      %p159 = scmp.eq.s32.totalorder %s26, 1
      %p160 = por %p158, %p159
      %p161 = scmp.ne.s32.totalorder %s150, %s151
      %p162 = scmp.eq.s32.totalorder %s26, 0
      %p163 = por %p161, %p162
      %p164 = scmp.ne.s32.totalorder %s150, %s151
      %p165 = scmp.eq.s32.totalorder %s27, 1
      %p166 = por %p164, %p165
      %p168 = scmp.ne.s32.totalorder %s151, %s167
      %p169 = scmp.eq.s32.totalorder %s27, 0
      %p170 = por %p168, %p169
      %s171 = ssub.s32 %s28, %s40
      %p172 = scmp.eq.s32.totalorder %s171, 0
      %s174 = sadd.s32 %s173, 1
      %s175 = scalar_select %p172, %s173, %s174
      %p178 = pneg %p172
      %p179 = scmp.eq.s32.totalorder %s21, 1
      %p180 = por %p178, %p179
      %p181 = scmp.ne.s32.totalorder %s173, %s176
      %p182 = scmp.eq.s32.totalorder %s21, 0
      %p183 = por %p181, %p182
      %p184 = scmp.ne.s32.totalorder %s173, %s176
      %p185 = scmp.eq.s32.totalorder %s26, 1
      %p186 = por %p184, %p185
      %p187 = scmp.ne.s32.totalorder %s176, %s177
      %p188 = scmp.eq.s32.totalorder %s26, 0
      %p189 = por %p187, %p188
      %p190 = scmp.ne.s32.totalorder %s176, %s177
      %p191 = scmp.eq.s32.totalorder %s27, 1
      %p192 = por %p190, %p191
      %p194 = scmp.ne.s32.totalorder %s177, %s193
      %p195 = scmp.eq.s32.totalorder %s27, 0
      %p196 = por %p194, %p195
      %s197 = ssub.s32 %s28, %s40
      %p198 = scmp.eq.s32.totalorder %s197, 0
      %s200 = sadd.s32 %s199, 1
      %s201 = scalar_select %p198, %s199, %s200
      %p204 = pneg %p198
      %p205 = scmp.eq.s32.totalorder %s21, 1
      %p206 = por %p204, %p205
      %p207 = scmp.ne.s32.totalorder %s199, %s202
      %p208 = scmp.eq.s32.totalorder %s21, 0
      %p209 = por %p207, %p208
      %p210 = scmp.ne.s32.totalorder %s199, %s202
      %p211 = scmp.eq.s32.totalorder %s26, 1
      %p212 = por %p210, %p211
      %p213 = scmp.ne.s32.totalorder %s202, %s203
      %p214 = scmp.eq.s32.totalorder %s26, 0
      %p215 = por %p213, %p214
      %p216 = scmp.ne.s32.totalorder %s202, %s203
      %p217 = scmp.eq.s32.totalorder %s27, 1
      %p218 = por %p216, %p217
      %p220 = scmp.ne.s32.totalorder %s203, %s219
      %p221 = scmp.eq.s32.totalorder %s27, 0
      %p222 = por %p220, %p221
      %s223 = ssub.s32 %s28, %s40
      %p224 = scmp.eq.s32.totalorder %s223, 0
      %s226 = sadd.s32 %s225, 1
      %s227 = scalar_select %p224, %s225, %s226
      %p230 = pneg %p224
      %p231 = scmp.eq.s32.totalorder %s21, 1
      %p232 = por %p230, %p231
      %p233 = scmp.ne.s32.totalorder %s225, %s228
      %p234 = scmp.eq.s32.totalorder %s21, 0
      %p235 = por %p233, %p234
      %p236 = scmp.ne.s32.totalorder %s225, %s228
      %p237 = scmp.eq.s32.totalorder %s26, 1
      %p238 = por %p236, %p237
      %p239 = scmp.ne.s32.totalorder %s228, %s229
      %p240 = scmp.eq.s32.totalorder %s26, 0
      %p241 = por %p239, %p240
      %p242 = scmp.ne.s32.totalorder %s228, %s229
      %p243 = scmp.eq.s32.totalorder %s27, 1
      %p244 = por %p242, %p243
      %p246 = scmp.ne.s32.totalorder %s229, %s245
      %p247 = scmp.eq.s32.totalorder %s27, 0
      %p248 = por %p246, %p247
      %s249 = ssub.s32 %s28, %s40
      %p250 = scmp.eq.s32.totalorder %s249, 0
      %s252 = sadd.s32 %s251, 1
      %s253 = scalar_select %p250, %s251, %s252
      %p256 = pneg %p250
      %p257 = scmp.eq.s32.totalorder %s21, 1
      %p258 = por %p256, %p257
      %p259 = scmp.ne.s32.totalorder %s251, %s254
      %p260 = scmp.eq.s32.totalorder %s21, 0
      %p261 = por %p259, %p260
      %p262 = scmp.ne.s32.totalorder %s251, %s254
      %p263 = scmp.eq.s32.totalorder %s26, 1
      %p264 = por %p262, %p263
      %p265 = scmp.ne.s32.totalorder %s254, %s255
      %p266 = scmp.eq.s32.totalorder %s26, 0
      %p267 = por %p265, %p266
      %p268 = scmp.ne.s32.totalorder %s254, %s255
      %p269 = scmp.eq.s32.totalorder %s27, 1
      %p270 = por %p268, %p269
      %p272 = scmp.ne.s32.totalorder %s255, %s271
      %p273 = scmp.eq.s32.totalorder %s27, 0
      %p274 = por %p272, %p273
      %s275 = ssub.s32 %s28, %s40
      %s276 = ssub.s32 %s29, %s36
      %s277 = sor.u32 %s275, %s276
      %p278 = scmp.eq.s32.totalorder %s277, 0
      %s280 = sadd.s32 %s279, 1
      %s281 = scalar_select %p278, %s279, %s280
      %p284 = pneg %p278
      %p285 = scmp.eq.s32.totalorder %s21, 1
      %p286 = por %p284, %p285
      %p287 = scmp.ne.s32.totalorder %s279, %s282
      %p288 = scmp.eq.s32.totalorder %s21, 0
      %p289 = por %p287, %p288
      %p290 = scmp.ne.s32.totalorder %s279, %s282
      %p291 = scmp.eq.s32.totalorder %s26, 1
      %p292 = por %p290, %p291
      %p293 = scmp.ne.s32.totalorder %s282, %s283
      %p294 = scmp.eq.s32.totalorder %s26, 0
      %p295 = por %p293, %p294
      %p296 = scmp.ne.s32.totalorder %s282, %s283
      %p297 = scmp.eq.s32.totalorder %s27, 1
      %p298 = por %p296, %p297
      %p300 = scmp.ne.s32.totalorder %s283, %s299
      %p301 = scmp.eq.s32.totalorder %s27, 0
      %p302 = por %p300, %p301
      %p303 = scmp.le.s32.totalorder 1, %s21
      %p304 = scmp.lt.s32.totalorder %s21, 3
      %p305 = pnand %p303, %p304
      %p306 = pneg %p305
      // Predicated region
      $region9: #{point_conv_lwf_forward.1} parent=5 // pred_check
        _
      $region10: #{point_conv_lwf_forward.1} parent=5 // pred_check_branch
        %308 = sbr.rel (%p305) target = $region12
      $region11: #{point_conv_lwf_forward.1} parent=5 // pred_region
        %s309 = ssub.s32 %s21, 1
        // Predicated region
        $region13: #{point_conv_lwf_forward.1} parent=11 // pred_check
          %p310 = pneg %p59
        $region14: #{point_conv_lwf_forward.1} parent=11 // pred_check_branch
          %312 = sbr.rel (%p310) target = $region16
        $region15: #{point_conv_lwf_forward.1} parent=11 // pred_region
          %p313 = scmp.lt.s32.totalorder %s31, 0
          %s314 = scalar_select %p313, %s31, 0
          %s315 = smul.addr %s314, 8
          %s316 = scalar_lea.vmem %s0, %s315
        $region16: #{point_conv_lwf_forward.1} parent=11 // pred_fallthru
          _
      $region12: #{point_conv_lwf_forward.1} parent=5 // pred_fallthru
        _
      %p317 = scmp.lt.s32.totalorder %s21, 2
      // Predicated region
      $region17: #{point_conv_lwf_forward.1} parent=5 // pred_check
        %p318 = pneg %p317
      $region18: #{point_conv_lwf_forward.1} parent=5 // pred_check_branch
        %320 = sbr.rel (%p318) target = $region20
      $region19: #{point_conv_lwf_forward.1} parent=5 // pred_region
        // Predicated region
        $region21: #{point_conv_lwf_forward.1} parent=19 // pred_check
          %p321 = pneg %p79
        $region22: #{point_conv_lwf_forward.1} parent=19 // pred_check_branch
          %323 = sbr.rel (%p321) target = $region24
        $region23: #{point_conv_lwf_forward.1} parent=19 // pred_region
          %s324 = sand.u32 %s69, 1
          %s325 = scalar_lea.sflag [#allocation3], %s324
          %s326 = sand.u32 %s69, 1
          %s327 = smul.addr %s326, 1024
          %s328 = scalar_lea.vmem [#allocation2], %s327
          %s330 = ssub.s32 16384, 16384
          %331 = vsyncadd %s325, %s330
          %s332 = smul.addr %s28, 128
          %s333 = smul.addr %s332, 128
          %s334 = scalar_lea.hbm %s1, %s333
          %s335 = sshll.u32 %s328, 4
          %s336 = int_to_ptr.vmem [resolvable:$true] %s335
          %341 = dma.hbm_to_vmem [thread:$0]  %s334, 16384, %s336, %s325, 512, 512, 32
        $region24: #{point_conv_lwf_forward.1} parent=19 // pred_fallthru
          _
        // Predicated region
        $region25: #{point_conv_lwf_forward.1} parent=19 // pred_check
          %p342 = pneg %p105
        $region26: #{point_conv_lwf_forward.1} parent=19 // pred_check_branch
          %344 = sbr.rel (%p342) target = $region28
        $region27: #{point_conv_lwf_forward.1} parent=19 // pred_region
          %p345 = scmp.lt.s32.totalorder %s28, 1
          %s346 = scalar_select %p345, %s28, 1
          %s347 = smul.addr %s346, 4
          %s348 = scalar_lea.vmem %s2, %s347
        $region28: #{point_conv_lwf_forward.1} parent=19 // pred_fallthru
          _
        // Predicated region
        $region29: #{point_conv_lwf_forward.1} parent=19 // pred_check
          %p349 = pneg %p131
        $region30: #{point_conv_lwf_forward.1} parent=19 // pred_check_branch
          %351 = sbr.rel (%p349) target = $region32
        $region31: #{point_conv_lwf_forward.1} parent=19 // pred_region
          %p352 = scmp.lt.s32.totalorder %s28, 1
          %s353 = scalar_select %p352, %s28, 1
          %s354 = smul.addr %s353, 4
          %s355 = scalar_lea.vmem %s3, %s354
        $region32: #{point_conv_lwf_forward.1} parent=19 // pred_fallthru
          _
        // Predicated region
        $region33: #{point_conv_lwf_forward.1} parent=19 // pred_check
          %p356 = pneg %p157
        $region34: #{point_conv_lwf_forward.1} parent=19 // pred_check_branch
          %358 = sbr.rel (%p356) target = $region36
        $region35: #{point_conv_lwf_forward.1} parent=19 // pred_region
          %s359 = sand.u32 %s21, 1
          %s360 = scalar_lea.sflag [#allocation5], %s359
          %s361 = sand.u32 %s147, 1
          %s362 = smul.addr %s361, 256
          %s363 = scalar_lea.vmem [#allocation4], %s362
          %s365 = ssub.s32 4096, 4096
          %366 = vsyncadd %s360, %s365
          %s367 = smul.addr %s28, 32
          %s368 = smul.addr %s367, 128
          %s369 = scalar_lea.hbm %s4, %s368
          %s370 = sshll.u32 %s363, 4
          %s371 = int_to_ptr.vmem [resolvable:$true] %s370
          %376 = dma.hbm_to_vmem [thread:$0]  %s369, 4096, %s371, %s360, 256, 256, 16
        $region36: #{point_conv_lwf_forward.1} parent=19 // pred_fallthru
          _
        // Predicated region
        $region37: #{point_conv_lwf_forward.1} parent=19 // pred_check
          %p377 = pneg %p183
        $region38: #{point_conv_lwf_forward.1} parent=19 // pred_check_branch
          %379 = sbr.rel (%p377) target = $region40
        $region39: #{point_conv_lwf_forward.1} parent=19 // pred_region
          %p380 = scmp.lt.s32.totalorder %s28, 1
          %s381 = scalar_select %p380, %s28, 1
          %s382 = smul.addr %s381, 2
          %s383 = scalar_lea.vmem %s5, %s382
        $region40: #{point_conv_lwf_forward.1} parent=19 // pred_fallthru
          _
        // Predicated region
        $region41: #{point_conv_lwf_forward.1} parent=19 // pred_check
          %p384 = pneg %p209
        $region42: #{point_conv_lwf_forward.1} parent=19 // pred_check_branch
          %386 = sbr.rel (%p384) target = $region44
        $region43: #{point_conv_lwf_forward.1} parent=19 // pred_region
          %p387 = scmp.lt.s32.totalorder %s28, 1
          %s388 = scalar_select %p387, %s28, 1
          %s389 = smul.addr %s388, 2
          %s390 = scalar_lea.vmem %s6, %s389
        $region44: #{point_conv_lwf_forward.1} parent=19 // pred_fallthru
          _
        // Predicated region
        $region45: #{point_conv_lwf_forward.1} parent=19 // pred_check
          %p391 = pneg %p235
        $region46: #{point_conv_lwf_forward.1} parent=19 // pred_check_branch
          %393 = sbr.rel (%p391) target = $region48
        $region47: #{point_conv_lwf_forward.1} parent=19 // pred_region
          %s394 = sand.u32 %s21, 1
          %s395 = scalar_lea.sflag [#allocation5], %s394
          %s396 = sand.u32 %s225, 1
          %s397 = smul.addr %s396, 128
          %s398 = scalar_lea.vmem [#allocation6], %s397
          %s400 = ssub.s32 2048, 2048
          %401 = vsyncadd %s395, %s400
          %s402 = smul.addr %s28, 32
          %s403 = smul.addr %s402, 64
          %s404 = scalar_lea.hbm %s7, %s403
          %s405 = sshll.u32 %s398, 4
          %s406 = int_to_ptr.vmem [resolvable:$true] %s405
          %411 = dma.hbm_to_vmem [thread:$0]  %s404, 2048, %s406, %s395, 64, 64, 4
        $region48: #{point_conv_lwf_forward.1} parent=19 // pred_fallthru
          _
        // Predicated region
        $region49: #{point_conv_lwf_forward.1} parent=19 // pred_check
          %p412 = pneg %p261
        $region50: #{point_conv_lwf_forward.1} parent=19 // pred_check_branch
          %414 = sbr.rel (%p412) target = $region52
        $region51: #{point_conv_lwf_forward.1} parent=19 // pred_region
          %p415 = scmp.lt.s32.totalorder %s28, 1
          %s416 = scalar_select %p415, %s28, 1
          %s417 = scalar_lea.vmem %s8, %s416
        $region52: #{point_conv_lwf_forward.1} parent=19 // pred_fallthru
          _
      $region20: #{point_conv_lwf_forward.1} parent=5 // pred_fallthru
        _
      %p418 = scmp.le.s32.totalorder 1, %s21
      %p419 = scmp.lt.s32.totalorder %s21, 3
      %p420 = pnand %p418, %p419
      %p421 = pneg %p420
      // Predicated region
      $region53: #{point_conv_lwf_forward.1} parent=5 // pred_check
        _
      $region54: #{point_conv_lwf_forward.1} parent=5 // pred_check_branch
        %423 = sbr.rel (%p420) target = $region56
      $region55: #{point_conv_lwf_forward.1} parent=5 // pred_region
        %s424 = ssub.s32 %s21, 1
        %s425 = sand.u32 %s72, 1
        %s426 = scalar_lea.sflag [#allocation3], %s425
        %s427 = sand.u32 %s72, 1
        %s428 = smul.addr %s427, 1024
        %s429 = scalar_lea.vmem [#allocation2], %s428
        // Predicated region
        $region57: #{point_conv_lwf_forward.1} parent=55 // pred_check
          %p430 = pneg %p85
        $region58: #{point_conv_lwf_forward.1} parent=55 // pred_check_branch
          %432 = sbr.rel (%p430) target = $region60
        $region59: #{point_conv_lwf_forward.1} parent=55 // pred_region
          %433 = dma.done %s426, 16384
        $region60: #{point_conv_lwf_forward.1} parent=55 // pred_fallthru
          _
        %s434 = sand.u32 %s26, 1
        %s435 = scalar_lea.sflag [#allocation5], %s434
        %s436 = sand.u32 %s150, 1
        %s437 = smul.addr %s436, 256
        %s438 = scalar_lea.vmem [#allocation4], %s437
        // Predicated region
        $region61: #{point_conv_lwf_forward.1} parent=55 // pred_check
          %p439 = pneg %p163
        $region62: #{point_conv_lwf_forward.1} parent=55 // pred_check_branch
          %441 = sbr.rel (%p439) target = $region64
        $region63: #{point_conv_lwf_forward.1} parent=55 // pred_region
          %442 = dma.done %s435, 4096
        $region64: #{point_conv_lwf_forward.1} parent=55 // pred_fallthru
          _
        %s443 = sand.u32 %s26, 1
        %s444 = scalar_lea.sflag [#allocation5], %s443
        %s445 = sand.u32 %s228, 1
        %s446 = smul.addr %s445, 128
        %s447 = scalar_lea.vmem [#allocation6], %s446
        // Predicated region
        $region65: #{point_conv_lwf_forward.1} parent=55 // pred_check
          %p448 = pneg %p241
        $region66: #{point_conv_lwf_forward.1} parent=55 // pred_check_branch
          %450 = sbr.rel (%p448) target = $region68
        $region67: #{point_conv_lwf_forward.1} parent=55 // pred_region
          %451 = dma.done %s444, 2048
        $region68: #{point_conv_lwf_forward.1} parent=55 // pred_fallthru
          _
        %p452 = scmp.lt.s32.totalorder %s31, 0
        %s453 = scalar_select %p452, %s31, 0
        %s454 = smul.addr %s453, 8
        %s455 = scalar_lea.vmem %s0, %s454
        %p456 = pneg %p59
        %p457 = pneg %p56
        %s458 = sand.u32 %s72, 1
        %s459 = scalar_lea.sflag [#allocation3], %s458
        %s460 = sand.u32 %s72, 1
        %s461 = smul.addr %s460, 1024
        %s462 = scalar_lea.vmem [#allocation2], %s461
        %p463 = pneg %p85
        %p464 = pneg %p82
        %p465 = scmp.lt.s32.totalorder %s30, 1
        %s466 = scalar_select %p465, %s30, 1
        %s467 = smul.addr %s466, 4
        %s468 = scalar_lea.vmem %s2, %s467
        %p469 = pneg %p111
        %p470 = pneg %p108
        %p471 = scmp.lt.s32.totalorder %s30, 1
        %s472 = scalar_select %p471, %s30, 1
        %s473 = smul.addr %s472, 4
        %s474 = scalar_lea.vmem %s3, %s473
        %p475 = pneg %p137
        %p476 = pneg %p134
        %s477 = sand.u32 %s26, 1
        %s478 = scalar_lea.sflag [#allocation5], %s477
        %s479 = sand.u32 %s150, 1
        %s480 = smul.addr %s479, 256
        %s481 = scalar_lea.vmem [#allocation4], %s480
        %p482 = pneg %p163
        %p483 = pneg %p160
        %p484 = scmp.lt.s32.totalorder %s30, 1
        %s485 = scalar_select %p484, %s30, 1
        %s486 = smul.addr %s485, 2
        %s487 = scalar_lea.vmem %s5, %s486
        %p488 = pneg %p189
        %p489 = pneg %p186
        %p490 = scmp.lt.s32.totalorder %s30, 1
        %s491 = scalar_select %p490, %s30, 1
        %s492 = smul.addr %s491, 2
        %s493 = scalar_lea.vmem %s6, %s492
        %p494 = pneg %p215
        %p495 = pneg %p212
        %s496 = sand.u32 %s26, 1
        %s497 = scalar_lea.sflag [#allocation5], %s496
        %s498 = sand.u32 %s228, 1
        %s499 = smul.addr %s498, 128
        %s500 = scalar_lea.vmem [#allocation6], %s499
        %p501 = pneg %p241
        %p502 = pneg %p238
        %p503 = scmp.lt.s32.totalorder %s30, 1
        %s504 = scalar_select %p503, %s30, 1
        %s505 = scalar_lea.vmem %s8, %s504
        %p506 = pneg %p267
        %p507 = pneg %p264
        %p508 = pneg %p295
        %p509 = pneg %p292
        %p510 = scmp.lt.s32.totalorder %s30, 1
        %s511 = scalar_select %p510, %s30, 1
        %p512 = scmp.lt.s32.totalorder %s31, 0
        %s513 = scalar_select %p512, %s31, 0
        %s514 = sadd.s32 %s513, %s511
        %s515 = smul.addr %s514, 2
        %s516 = scalar_lea.vmem %s9, %s515
        %p517 = scmp.lt.s32.totalorder %s31, 0
        %s518 = scalar_select %p517, %s31, 0
        %s519 = smul.addr %s518, 8
        %s520 = scalar_lea.vmem %s0, %s519
        %p521 = scmp.lt.s32.totalorder %s30, 1
        %s522 = scalar_select %p521, %s30, 1
        %s523 = smul.addr %s522, 4
        %s524 = scalar_lea.vmem %s2, %s523
        %p525 = scmp.lt.s32.totalorder %s30, 1
        %s526 = scalar_select %p525, %s30, 1
        %s527 = smul.addr %s526, 4
        %s528 = scalar_lea.vmem %s3, %s527
        %p529 = scmp.lt.s32.totalorder %s30, 1
        %s530 = scalar_select %p529, %s30, 1
        %s531 = smul.addr %s530, 2
        %s532 = scalar_lea.vmem %s5, %s531
        %p533 = scmp.lt.s32.totalorder %s30, 1
        %s534 = scalar_select %p533, %s30, 1
        %s535 = smul.addr %s534, 2
        %s536 = scalar_lea.vmem %s6, %s535
        %p537 = scmp.lt.s32.totalorder %s30, 1
        %s538 = scalar_select %p537, %s30, 1
        %s539 = scalar_lea.vmem %s8, %s538
        %p540 = scmp.lt.s32.totalorder %s30, 1
        %s541 = scalar_select %p540, %s30, 1
        %p542 = scmp.lt.s32.totalorder %s31, 0
        %s543 = scalar_select %p542, %s31, 0
        %s544 = sadd.s32 %s543, %s541
        %s545 = smul.addr %s544, 2
        %s546 = scalar_lea.vmem %s9, %s545
        %v548 = vld [vmem:[%s520] sm:$0xff]
        %v549 = vld [vmem:[%s429] sm:$0xff]
        %v550 = vld [vmem:[%s429 + $0x8] sm:$0xff]
        %v551 = vld [vmem:[%s429 + $0x10] sm:$0xff]
        %v552 = vld [vmem:[%s429 + $0x18] sm:$0xff]
        %v553 = vld [vmem:[%s429 + $0x20] sm:$0xff]
        %v554 = vld [vmem:[%s429 + $0x28] sm:$0xff]
        %v555 = vld [vmem:[%s429 + $0x30] sm:$0xff]
        %v556 = vld [vmem:[%s429 + $0x38] sm:$0xff]
        %v557 = vld [vmem:[%s429 + $0x40] sm:$0xff]
        %v558 = vld [vmem:[%s429 + $0x48] sm:$0xff]
        %v559 = vld [vmem:[%s429 + $0x50] sm:$0xff]
        %v560 = vld [vmem:[%s429 + $0x58] sm:$0xff]
        %v561 = vld [vmem:[%s429 + $0x60] sm:$0xff]
        %v562 = vld [vmem:[%s429 + $0x68] sm:$0xff]
        %v563 = vld [vmem:[%s429 + $0x70] sm:$0xff]
        %v564 = vld [vmem:[%s429 + $0x78] sm:$0xff]
        %v565 = vld [vmem:[%s429 + $0x80] sm:$0xff]
        %v566 = vld [vmem:[%s429 + $0x88] sm:$0xff]
        %v567 = vld [vmem:[%s429 + $0x90] sm:$0xff]
        %v568 = vld [vmem:[%s429 + $0x98] sm:$0xff]
        %v569 = vld [vmem:[%s429 + $0xa0] sm:$0xff]
        %v570 = vld [vmem:[%s429 + $0xa8] sm:$0xff]
        %v571 = vld [vmem:[%s429 + $0xb0] sm:$0xff]
        %v572 = vld [vmem:[%s429 + $0xb8] sm:$0xff]
        %v573 = vld [vmem:[%s429 + $0xc0] sm:$0xff]
        %v574 = vld [vmem:[%s429 + $0xc8] sm:$0xff]
        %v575 = vld [vmem:[%s429 + $0xd0] sm:$0xff]
        %v576 = vld [vmem:[%s429 + $0xd8] sm:$0xff]
        %v577 = vld [vmem:[%s429 + $0xe0] sm:$0xff]
        %v578 = vld [vmem:[%s429 + $0xe8] sm:$0xff]
        %v579 = vld [vmem:[%s429 + $0xf0] sm:$0xff]
        %v580 = vld [vmem:[%s429 + $0xf8] sm:$0xff]
        %v581 = vld [vmem:[%s429 + $0x100] sm:$0xff]
        %v582 = vld [vmem:[%s429 + $0x108] sm:$0xff]
        %v583 = vld [vmem:[%s429 + $0x110] sm:$0xff]
        %v584 = vld [vmem:[%s429 + $0x118] sm:$0xff]
        %v585 = vld [vmem:[%s429 + $0x120] sm:$0xff]
        %v586 = vld [vmem:[%s429 + $0x128] sm:$0xff]
        %v587 = vld [vmem:[%s429 + $0x130] sm:$0xff]
        %v588 = vld [vmem:[%s429 + $0x138] sm:$0xff]
        %v589 = vld [vmem:[%s429 + $0x140] sm:$0xff]
        %v590 = vld [vmem:[%s429 + $0x148] sm:$0xff]
        %v591 = vld [vmem:[%s429 + $0x150] sm:$0xff]
        %v592 = vld [vmem:[%s429 + $0x158] sm:$0xff]
        %v593 = vld [vmem:[%s429 + $0x160] sm:$0xff]
        %v594 = vld [vmem:[%s429 + $0x168] sm:$0xff]
        %v595 = vld [vmem:[%s429 + $0x170] sm:$0xff]
        %v596 = vld [vmem:[%s429 + $0x178] sm:$0xff]
        %v597 = vld [vmem:[%s429 + $0x180] sm:$0xff]
        %v598 = vld [vmem:[%s429 + $0x188] sm:$0xff]
        %v599 = vld [vmem:[%s429 + $0x190] sm:$0xff]
        %v600 = vld [vmem:[%s429 + $0x198] sm:$0xff]
        %v601 = vld [vmem:[%s429 + $0x1a0] sm:$0xff]
        %v602 = vld [vmem:[%s429 + $0x1a8] sm:$0xff]
        %v603 = vld [vmem:[%s429 + $0x1b0] sm:$0xff]
        %v604 = vld [vmem:[%s429 + $0x1b8] sm:$0xff]
        %v605 = vld [vmem:[%s429 + $0x1c0] sm:$0xff]
        %v606 = vld [vmem:[%s429 + $0x1c8] sm:$0xff]
        %v607 = vld [vmem:[%s429 + $0x1d0] sm:$0xff]
        %v608 = vld [vmem:[%s429 + $0x1d8] sm:$0xff]
        %v609 = vld [vmem:[%s429 + $0x1e0] sm:$0xff]
        %v610 = vld [vmem:[%s429 + $0x1e8] sm:$0xff]
        %v611 = vld [vmem:[%s429 + $0x1f0] sm:$0xff]
        %v612 = vld [vmem:[%s429 + $0x1f8] sm:$0xff]
        %v613 = vld [vmem:[%s429 + $0x200] sm:$0xff]
        %v614 = vld [vmem:[%s429 + $0x208] sm:$0xff]
        %v615 = vld [vmem:[%s429 + $0x210] sm:$0xff]
        %v616 = vld [vmem:[%s429 + $0x218] sm:$0xff]
        %v617 = vld [vmem:[%s429 + $0x220] sm:$0xff]
        %v618 = vld [vmem:[%s429 + $0x228] sm:$0xff]
        %v619 = vld [vmem:[%s429 + $0x230] sm:$0xff]
        %v620 = vld [vmem:[%s429 + $0x238] sm:$0xff]
        %v621 = vld [vmem:[%s429 + $0x240] sm:$0xff]
        %v622 = vld [vmem:[%s429 + $0x248] sm:$0xff]
        %v623 = vld [vmem:[%s429 + $0x250] sm:$0xff]
        %v624 = vld [vmem:[%s429 + $0x258] sm:$0xff]
        %v625 = vld [vmem:[%s429 + $0x260] sm:$0xff]
        %v626 = vld [vmem:[%s429 + $0x268] sm:$0xff]
        %v627 = vld [vmem:[%s429 + $0x270] sm:$0xff]
        %v628 = vld [vmem:[%s429 + $0x278] sm:$0xff]
        %v629 = vld [vmem:[%s429 + $0x280] sm:$0xff]
        %v630 = vld [vmem:[%s429 + $0x288] sm:$0xff]
        %v631 = vld [vmem:[%s429 + $0x290] sm:$0xff]
        %v632 = vld [vmem:[%s429 + $0x298] sm:$0xff]
        %v633 = vld [vmem:[%s429 + $0x2a0] sm:$0xff]
        %v634 = vld [vmem:[%s429 + $0x2a8] sm:$0xff]
        %v635 = vld [vmem:[%s429 + $0x2b0] sm:$0xff]
        %v636 = vld [vmem:[%s429 + $0x2b8] sm:$0xff]
        %v637 = vld [vmem:[%s429 + $0x2c0] sm:$0xff]
        %v638 = vld [vmem:[%s429 + $0x2c8] sm:$0xff]
        %v639 = vld [vmem:[%s429 + $0x2d0] sm:$0xff]
        %v640 = vld [vmem:[%s429 + $0x2d8] sm:$0xff]
        %v641 = vld [vmem:[%s429 + $0x2e0] sm:$0xff]
        %v642 = vld [vmem:[%s429 + $0x2e8] sm:$0xff]
        %v643 = vld [vmem:[%s429 + $0x2f0] sm:$0xff]
        %v644 = vld [vmem:[%s429 + $0x2f8] sm:$0xff]
        %v645 = vld [vmem:[%s429 + $0x300] sm:$0xff]
        %v646 = vld [vmem:[%s429 + $0x308] sm:$0xff]
        %v647 = vld [vmem:[%s429 + $0x310] sm:$0xff]
        %v648 = vld [vmem:[%s429 + $0x318] sm:$0xff]
        %v649 = vld [vmem:[%s429 + $0x320] sm:$0xff]
        %v650 = vld [vmem:[%s429 + $0x328] sm:$0xff]
        %v651 = vld [vmem:[%s429 + $0x330] sm:$0xff]
        %v652 = vld [vmem:[%s429 + $0x338] sm:$0xff]
        %v653 = vld [vmem:[%s429 + $0x340] sm:$0xff]
        %v654 = vld [vmem:[%s429 + $0x348] sm:$0xff]
        %v655 = vld [vmem:[%s429 + $0x350] sm:$0xff]
        %v656 = vld [vmem:[%s429 + $0x358] sm:$0xff]
        %v657 = vld [vmem:[%s429 + $0x360] sm:$0xff]
        %v658 = vld [vmem:[%s429 + $0x368] sm:$0xff]
        %v659 = vld [vmem:[%s429 + $0x370] sm:$0xff]
        %v660 = vld [vmem:[%s429 + $0x378] sm:$0xff]
        %v661 = vld [vmem:[%s429 + $0x380] sm:$0xff]
        %v662 = vld [vmem:[%s429 + $0x388] sm:$0xff]
        %v663 = vld [vmem:[%s429 + $0x390] sm:$0xff]
        %v664 = vld [vmem:[%s429 + $0x398] sm:$0xff]
        %v665 = vld [vmem:[%s429 + $0x3a0] sm:$0xff]
        %v666 = vld [vmem:[%s429 + $0x3a8] sm:$0xff]
        %v667 = vld [vmem:[%s429 + $0x3b0] sm:$0xff]
        %v668 = vld [vmem:[%s429 + $0x3b8] sm:$0xff]
        %v669 = vld [vmem:[%s429 + $0x3c0] sm:$0xff]
        %v670 = vld [vmem:[%s429 + $0x3c8] sm:$0xff]
        %v671 = vld [vmem:[%s429 + $0x3d0] sm:$0xff]
        %v672 = vld [vmem:[%s429 + $0x3d8] sm:$0xff]
        %v673 = vld [vmem:[%s429 + $0x3e0] sm:$0xff]
        %v674 = vld [vmem:[%s429 + $0x3e8] sm:$0xff]
        %v675 = vld [vmem:[%s429 + $0x3f0] sm:$0xff]
        %v676 = vld [vmem:[%s429 + $0x3f8] sm:$0xff]
        %v677 = vunpack.c.l.s8.bf16 %v549
        %v678 = vunpack.c.l.s8.bf16 %v550
        %v679 = vunpack.c.l.s8.bf16 %v551
        %v680 = vunpack.c.l.s8.bf16 %v552
        %v681 = vunpack.c.h.s8.bf16 %v549
        %v682 = vunpack.c.h.s8.bf16 %v550
        %v683 = vunpack.c.h.s8.bf16 %v551
        %v684 = vunpack.c.h.s8.bf16 %v552
        %v685 = vunpack.c.l.s8.bf16 %v553
        %v686 = vunpack.c.l.s8.bf16 %v554
        %v687 = vunpack.c.l.s8.bf16 %v555
        %v688 = vunpack.c.l.s8.bf16 %v556
        %v689 = vunpack.c.h.s8.bf16 %v553
        %v690 = vunpack.c.h.s8.bf16 %v554
        %v691 = vunpack.c.h.s8.bf16 %v555
        %v692 = vunpack.c.h.s8.bf16 %v556
        %v693 = vunpack.c.l.s8.bf16 %v557
        %v694 = vunpack.c.l.s8.bf16 %v558
        %v695 = vunpack.c.l.s8.bf16 %v559
        %v696 = vunpack.c.l.s8.bf16 %v560
        %v697 = vunpack.c.h.s8.bf16 %v557
        %v698 = vunpack.c.h.s8.bf16 %v558
        %v699 = vunpack.c.h.s8.bf16 %v559
        %v700 = vunpack.c.h.s8.bf16 %v560
        %v701 = vunpack.c.l.s8.bf16 %v561
        %v702 = vunpack.c.l.s8.bf16 %v562
        %v703 = vunpack.c.l.s8.bf16 %v563
        %v704 = vunpack.c.l.s8.bf16 %v564
        %v705 = vunpack.c.h.s8.bf16 %v561
        %v706 = vunpack.c.h.s8.bf16 %v562
        %v707 = vunpack.c.h.s8.bf16 %v563
        %v708 = vunpack.c.h.s8.bf16 %v564
        %v709 = vunpack.c.l.s8.bf16 %v565
        %v710 = vunpack.c.l.s8.bf16 %v566
        %v711 = vunpack.c.l.s8.bf16 %v567
        %v712 = vunpack.c.l.s8.bf16 %v568
        %v713 = vunpack.c.h.s8.bf16 %v565
        %v714 = vunpack.c.h.s8.bf16 %v566
        %v715 = vunpack.c.h.s8.bf16 %v567
        %v716 = vunpack.c.h.s8.bf16 %v568
        %v717 = vunpack.c.l.s8.bf16 %v569
        %v718 = vunpack.c.l.s8.bf16 %v570
        %v719 = vunpack.c.l.s8.bf16 %v571
        %v720 = vunpack.c.l.s8.bf16 %v572
        %v721 = vunpack.c.h.s8.bf16 %v569
        %v722 = vunpack.c.h.s8.bf16 %v570
        %v723 = vunpack.c.h.s8.bf16 %v571
        %v724 = vunpack.c.h.s8.bf16 %v572
        %v725 = vunpack.c.l.s8.bf16 %v573
        %v726 = vunpack.c.l.s8.bf16 %v574
        %v727 = vunpack.c.l.s8.bf16 %v575
        %v728 = vunpack.c.l.s8.bf16 %v576
        %v729 = vunpack.c.h.s8.bf16 %v573
        %v730 = vunpack.c.h.s8.bf16 %v574
        %v731 = vunpack.c.h.s8.bf16 %v575
        %v732 = vunpack.c.h.s8.bf16 %v576
        %v733 = vunpack.c.l.s8.bf16 %v577
        %v734 = vunpack.c.l.s8.bf16 %v578
        %v735 = vunpack.c.l.s8.bf16 %v579
        %v736 = vunpack.c.l.s8.bf16 %v580
        %v737 = vunpack.c.h.s8.bf16 %v577
        %v738 = vunpack.c.h.s8.bf16 %v578
        %v739 = vunpack.c.h.s8.bf16 %v579
        %v740 = vunpack.c.h.s8.bf16 %v580
        %v741 = vunpack.c.l.s8.bf16 %v581
        %v742 = vunpack.c.l.s8.bf16 %v582
        %v743 = vunpack.c.l.s8.bf16 %v583
        %v744 = vunpack.c.l.s8.bf16 %v584
        %v745 = vunpack.c.h.s8.bf16 %v581
        %v746 = vunpack.c.h.s8.bf16 %v582
        %v747 = vunpack.c.h.s8.bf16 %v583
        %v748 = vunpack.c.h.s8.bf16 %v584
        %v749 = vunpack.c.l.s8.bf16 %v585
        %v750 = vunpack.c.l.s8.bf16 %v586
        %v751 = vunpack.c.l.s8.bf16 %v587
        %v752 = vunpack.c.l.s8.bf16 %v588
        %v753 = vunpack.c.h.s8.bf16 %v585
        %v754 = vunpack.c.h.s8.bf16 %v586
        %v755 = vunpack.c.h.s8.bf16 %v587
        %v756 = vunpack.c.h.s8.bf16 %v588
        %v757 = vunpack.c.l.s8.bf16 %v589
        %v758 = vunpack.c.l.s8.bf16 %v590
        %v759 = vunpack.c.l.s8.bf16 %v591
        %v760 = vunpack.c.l.s8.bf16 %v592
        %v761 = vunpack.c.h.s8.bf16 %v589
        %v762 = vunpack.c.h.s8.bf16 %v590
        %v763 = vunpack.c.h.s8.bf16 %v591
        %v764 = vunpack.c.h.s8.bf16 %v592
        %v765 = vunpack.c.l.s8.bf16 %v593
        %v766 = vunpack.c.l.s8.bf16 %v594
        %v767 = vunpack.c.l.s8.bf16 %v595
        %v768 = vunpack.c.l.s8.bf16 %v596
        %v769 = vunpack.c.h.s8.bf16 %v593
        %v770 = vunpack.c.h.s8.bf16 %v594
        %v771 = vunpack.c.h.s8.bf16 %v595
        %v772 = vunpack.c.h.s8.bf16 %v596
        %v773 = vunpack.c.l.s8.bf16 %v597
        %v774 = vunpack.c.l.s8.bf16 %v598
        %v775 = vunpack.c.l.s8.bf16 %v599
        %v776 = vunpack.c.l.s8.bf16 %v600
        %v777 = vunpack.c.h.s8.bf16 %v597
        %v778 = vunpack.c.h.s8.bf16 %v598
        %v779 = vunpack.c.h.s8.bf16 %v599
        %v780 = vunpack.c.h.s8.bf16 %v600
        %v781 = vunpack.c.l.s8.bf16 %v601
        %v782 = vunpack.c.l.s8.bf16 %v602
        %v783 = vunpack.c.l.s8.bf16 %v603
        %v784 = vunpack.c.l.s8.bf16 %v604
        %v785 = vunpack.c.h.s8.bf16 %v601
        %v786 = vunpack.c.h.s8.bf16 %v602
        %v787 = vunpack.c.h.s8.bf16 %v603
        %v788 = vunpack.c.h.s8.bf16 %v604
        %v789 = vunpack.c.l.s8.bf16 %v605
        %v790 = vunpack.c.l.s8.bf16 %v606
        %v791 = vunpack.c.l.s8.bf16 %v607
        %v792 = vunpack.c.l.s8.bf16 %v608
        %v793 = vunpack.c.h.s8.bf16 %v605
        %v794 = vunpack.c.h.s8.bf16 %v606
        %v795 = vunpack.c.h.s8.bf16 %v607
        %v796 = vunpack.c.h.s8.bf16 %v608
        %v797 = vunpack.c.l.s8.bf16 %v609
        %v798 = vunpack.c.l.s8.bf16 %v610
        %v799 = vunpack.c.l.s8.bf16 %v611
        %v800 = vunpack.c.l.s8.bf16 %v612
        %v801 = vunpack.c.h.s8.bf16 %v609
        %v802 = vunpack.c.h.s8.bf16 %v610
        %v803 = vunpack.c.h.s8.bf16 %v611
        %v804 = vunpack.c.h.s8.bf16 %v612
        %v805 = vunpack.c.l.s8.bf16 %v613
        %v806 = vunpack.c.l.s8.bf16 %v614
        %v807 = vunpack.c.l.s8.bf16 %v615
        %v808 = vunpack.c.l.s8.bf16 %v616
        %v809 = vunpack.c.h.s8.bf16 %v613
        %v810 = vunpack.c.h.s8.bf16 %v614
        %v811 = vunpack.c.h.s8.bf16 %v615
        %v812 = vunpack.c.h.s8.bf16 %v616
        %v813 = vunpack.c.l.s8.bf16 %v617
        %v814 = vunpack.c.l.s8.bf16 %v618
        %v815 = vunpack.c.l.s8.bf16 %v619
        %v816 = vunpack.c.l.s8.bf16 %v620
        %v817 = vunpack.c.h.s8.bf16 %v617
        %v818 = vunpack.c.h.s8.bf16 %v618
        %v819 = vunpack.c.h.s8.bf16 %v619
        %v820 = vunpack.c.h.s8.bf16 %v620
        %v821 = vunpack.c.l.s8.bf16 %v621
        %v822 = vunpack.c.l.s8.bf16 %v622
        %v823 = vunpack.c.l.s8.bf16 %v623
        %v824 = vunpack.c.l.s8.bf16 %v624
        %v825 = vunpack.c.h.s8.bf16 %v621
        %v826 = vunpack.c.h.s8.bf16 %v622
        %v827 = vunpack.c.h.s8.bf16 %v623
        %v828 = vunpack.c.h.s8.bf16 %v624
        %v829 = vunpack.c.l.s8.bf16 %v625
        %v830 = vunpack.c.l.s8.bf16 %v626
        %v831 = vunpack.c.l.s8.bf16 %v627
        %v832 = vunpack.c.l.s8.bf16 %v628
        %v833 = vunpack.c.h.s8.bf16 %v625
        %v834 = vunpack.c.h.s8.bf16 %v626
        %v835 = vunpack.c.h.s8.bf16 %v627
        %v836 = vunpack.c.h.s8.bf16 %v628
        %v837 = vunpack.c.l.s8.bf16 %v629
        %v838 = vunpack.c.l.s8.bf16 %v630
        %v839 = vunpack.c.l.s8.bf16 %v631
        %v840 = vunpack.c.l.s8.bf16 %v632
        %v841 = vunpack.c.h.s8.bf16 %v629
        %v842 = vunpack.c.h.s8.bf16 %v630
        %v843 = vunpack.c.h.s8.bf16 %v631
        %v844 = vunpack.c.h.s8.bf16 %v632
        %v845 = vunpack.c.l.s8.bf16 %v633
        %v846 = vunpack.c.l.s8.bf16 %v634
        %v847 = vunpack.c.l.s8.bf16 %v635
        %v848 = vunpack.c.l.s8.bf16 %v636
        %v849 = vunpack.c.h.s8.bf16 %v633
        %v850 = vunpack.c.h.s8.bf16 %v634
        %v851 = vunpack.c.h.s8.bf16 %v635
        %v852 = vunpack.c.h.s8.bf16 %v636
        %v853 = vunpack.c.l.s8.bf16 %v637
        %v854 = vunpack.c.l.s8.bf16 %v638
        %v855 = vunpack.c.l.s8.bf16 %v639
        %v856 = vunpack.c.l.s8.bf16 %v640
        %v857 = vunpack.c.h.s8.bf16 %v637
        %v858 = vunpack.c.h.s8.bf16 %v638
        %v859 = vunpack.c.h.s8.bf16 %v639
        %v860 = vunpack.c.h.s8.bf16 %v640
        %v861 = vunpack.c.l.s8.bf16 %v641
        %v862 = vunpack.c.l.s8.bf16 %v642
        %v863 = vunpack.c.l.s8.bf16 %v643
        %v864 = vunpack.c.l.s8.bf16 %v644
        %v865 = vunpack.c.h.s8.bf16 %v641
        %v866 = vunpack.c.h.s8.bf16 %v642
        %v867 = vunpack.c.h.s8.bf16 %v643
        %v868 = vunpack.c.h.s8.bf16 %v644
        %v869 = vunpack.c.l.s8.bf16 %v645
        %v870 = vunpack.c.l.s8.bf16 %v646
        %v871 = vunpack.c.l.s8.bf16 %v647
        %v872 = vunpack.c.l.s8.bf16 %v648
        %v873 = vunpack.c.h.s8.bf16 %v645
        %v874 = vunpack.c.h.s8.bf16 %v646
        %v875 = vunpack.c.h.s8.bf16 %v647
        %v876 = vunpack.c.h.s8.bf16 %v648
        %v877 = vunpack.c.l.s8.bf16 %v649
        %v878 = vunpack.c.l.s8.bf16 %v650
        %v879 = vunpack.c.l.s8.bf16 %v651
        %v880 = vunpack.c.l.s8.bf16 %v652
        %v881 = vunpack.c.h.s8.bf16 %v649
        %v882 = vunpack.c.h.s8.bf16 %v650
        %v883 = vunpack.c.h.s8.bf16 %v651
        %v884 = vunpack.c.h.s8.bf16 %v652
        %v885 = vunpack.c.l.s8.bf16 %v653
        %v886 = vunpack.c.l.s8.bf16 %v654
        %v887 = vunpack.c.l.s8.bf16 %v655
        %v888 = vunpack.c.l.s8.bf16 %v656
        %v889 = vunpack.c.h.s8.bf16 %v653
        %v890 = vunpack.c.h.s8.bf16 %v654
        %v891 = vunpack.c.h.s8.bf16 %v655
        %v892 = vunpack.c.h.s8.bf16 %v656
        %v893 = vunpack.c.l.s8.bf16 %v657
        %v894 = vunpack.c.l.s8.bf16 %v658
        %v895 = vunpack.c.l.s8.bf16 %v659
        %v896 = vunpack.c.l.s8.bf16 %v660
        %v897 = vunpack.c.h.s8.bf16 %v657
        %v898 = vunpack.c.h.s8.bf16 %v658
        %v899 = vunpack.c.h.s8.bf16 %v659
        %v900 = vunpack.c.h.s8.bf16 %v660
        %v901 = vunpack.c.l.s8.bf16 %v661
        %v902 = vunpack.c.l.s8.bf16 %v662
        %v903 = vunpack.c.l.s8.bf16 %v663
        %v904 = vunpack.c.l.s8.bf16 %v664
        %v905 = vunpack.c.h.s8.bf16 %v661
        %v906 = vunpack.c.h.s8.bf16 %v662
        %v907 = vunpack.c.h.s8.bf16 %v663
        %v908 = vunpack.c.h.s8.bf16 %v664
        %v909 = vunpack.c.l.s8.bf16 %v665
        %v910 = vunpack.c.l.s8.bf16 %v666
        %v911 = vunpack.c.l.s8.bf16 %v667
        %v912 = vunpack.c.l.s8.bf16 %v668
        %v913 = vunpack.c.h.s8.bf16 %v665
        %v914 = vunpack.c.h.s8.bf16 %v666
        %v915 = vunpack.c.h.s8.bf16 %v667
        %v916 = vunpack.c.h.s8.bf16 %v668
        %v917 = vunpack.c.l.s8.bf16 %v669
        %v918 = vunpack.c.l.s8.bf16 %v670
        %v919 = vunpack.c.l.s8.bf16 %v671
        %v920 = vunpack.c.l.s8.bf16 %v672
        %v921 = vunpack.c.h.s8.bf16 %v669
        %v922 = vunpack.c.h.s8.bf16 %v670
        %v923 = vunpack.c.h.s8.bf16 %v671
        %v924 = vunpack.c.h.s8.bf16 %v672
        %v925 = vunpack.c.l.s8.bf16 %v673
        %v926 = vunpack.c.l.s8.bf16 %v674
        %v927 = vunpack.c.l.s8.bf16 %v675
        %v928 = vunpack.c.l.s8.bf16 %v676
        %v929 = vunpack.c.h.s8.bf16 %v673
        %v930 = vunpack.c.h.s8.bf16 %v674
        %v931 = vunpack.c.h.s8.bf16 %v675
        %v932 = vunpack.c.h.s8.bf16 %v676
        %v934 = vcombine.high %v548, %v548
        %v936 = vunpack.c.l.s4 1966171168
        %v937 = vunpack.c.0.s8 %v936
        %v938 = vlaneseq
        %v939 = vshrl.u32 %v938, 7
        %v940 = vsub.s32 %v937, %v939
        %v941 = vrot.slane %v548, %v940
        %v943 = vunpack.c.l.s4 1966171168
        %v944 = vunpack.c.0.s8 %v943
        %v945 = vlaneseq
        %v946 = vshrl.u32 %v945, 7
        %v947 = vsub.s32 %v944, %v946
        %v948 = vrot.slane %v934, %v947
        %v949 = vcombine.high %v941, %v941
        %v950 = vcombine.high %v948, %v948
        %v952 = vunpack.c.l.s4 1966171168
        %v953 = vunpack.c.0.s8 %v952
        %v954 = vlaneseq
        %v955 = vshrl.u32 %v954, 7
        %v956 = vsub.s32 %v953, %v955
        %v957 = vrot.slane %v941, %v956
        %v959 = vunpack.c.l.s4 1966171168
        %v960 = vunpack.c.0.s8 %v959
        %v961 = vlaneseq
        %v962 = vshrl.u32 %v961, 7
        %v963 = vsub.s32 %v960, %v962
        %v964 = vrot.slane %v948, %v963
        %v966 = vunpack.c.l.s4 1966171168
        %v967 = vunpack.c.0.s8 %v966
        %v968 = vlaneseq
        %v969 = vshrl.u32 %v968, 7
        %v970 = vsub.s32 %v967, %v969
        %v971 = vrot.slane %v949, %v970
        %v973 = vunpack.c.l.s4 1966171168
        %v974 = vunpack.c.0.s8 %v973
        %v975 = vlaneseq
        %v976 = vshrl.u32 %v975, 7
        %v977 = vsub.s32 %v974, %v976
        %v978 = vrot.slane %v950, %v977
        %v979 = vcombine.high %v957, %v957
        %v980 = vcombine.high %v964, %v964
        %v981 = vcombine.high %v971, %v971
        %v982 = vcombine.high %v978, %v978
        %991 = vmatprep.subr.bf16.mxu0 %v678
        %992 = vmatpush1.bf16.msra.mxu0 %v677
        %993 = vmatprep.subr.bf16.mxu0 %v682
        %994 = vmatpush1.bf16.msra.mxu0 %v681
        %995 = vmatprep.subr.bf16.mxu0 %v686
        %996 = vmatpush1.bf16.msra.mxu0 %v685
        %997 = vmatprep.subr.bf16.mxu0 %v690
        %998 = vmatpush1.bf16.msra.mxu0 %v689
        %999 = vmatprep.subr.bf16.mxu0 %v694
        %1000 = vmatpush1.bf16.msra.mxu0 %v693
        %1001 = vmatprep.subr.bf16.mxu0 %v698
        %1002 = vmatpush1.bf16.msra.mxu0 %v697
        %1003 = vmatprep.subr.bf16.mxu0 %v702
        %1004 = vmatpush1.bf16.msra.mxu0 %v701
        %1005 = vmatprep.subr.bf16.mxu0 %v706
        %1006 = vmatpush1.bf16.msra.mxu0 %v705
        %1007 = vmatprep.subr.bf16.mxu0 %v710
        %1008 = vmatpush1.bf16.msra.mxu0 %v709
        %1009 = vmatprep.subr.bf16.mxu0 %v714
        %1010 = vmatpush1.bf16.msra.mxu0 %v713
        %1011 = vmatprep.subr.bf16.mxu0 %v718
        %1012 = vmatpush1.bf16.msra.mxu0 %v717
        %1013 = vmatprep.subr.bf16.mxu0 %v722
        %1014 = vmatpush1.bf16.msra.mxu0 %v721
        %1015 = vmatprep.subr.bf16.mxu0 %v726
        %1016 = vmatpush1.bf16.msra.mxu0 %v725
        %1017 = vmatprep.subr.bf16.mxu0 %v730
        %1018 = vmatpush1.bf16.msra.mxu0 %v729
        %1019 = vmatprep.subr.bf16.mxu0 %v734
        %1020 = vmatpush1.bf16.msra.mxu0 %v733
        %1021 = vmatprep.subr.bf16.mxu0 %v738
        %1022 = vmatpush1.bf16.msra.mxu0 %v737
        %1023 = vmatprep.mubr.bf16.mxu0 %v971
        %1024 = vmatmul.mubr.bf16.gmra.mrb[0].mxu0 %v957
        %v1025 = vpop.f32.mrb[0].mxu0
        %v1026 = vadd.f32 0.0, %v1025
        %v1027 = vpop.f32.mrb[0].mxu0
        %v1028 = vadd.f32 0.0, %v1027
        %v1029 = vpop.f32.mrb[0].mxu0
        %v1030 = vpop.f32.mrb[0].mxu0
        %1031 = vdwg.mxu0
        %1032 = vmatprep.subr.bf16.mxu0 %v742
        %1033 = vmatpush1.bf16.msra.mxu0 %v741
        %1034 = vmatprep.subr.bf16.mxu0 %v746
        %1035 = vmatpush1.bf16.msra.mxu0 %v745
        %1036 = vmatprep.subr.bf16.mxu0 %v750
        %1037 = vmatpush1.bf16.msra.mxu0 %v749
        %1038 = vmatprep.subr.bf16.mxu0 %v754
        %1039 = vmatpush1.bf16.msra.mxu0 %v753
        %1040 = vmatprep.subr.bf16.mxu0 %v758
        %1041 = vmatpush1.bf16.msra.mxu0 %v757
        %1042 = vmatprep.subr.bf16.mxu0 %v762
        %1043 = vmatpush1.bf16.msra.mxu0 %v761
        %1044 = vmatprep.subr.bf16.mxu0 %v766
        %1045 = vmatpush1.bf16.msra.mxu0 %v765
        %1046 = vmatprep.subr.bf16.mxu0 %v770
        %1047 = vmatpush1.bf16.msra.mxu0 %v769
        %1048 = vmatprep.subr.bf16.mxu0 %v774
        %1049 = vmatpush1.bf16.msra.mxu0 %v773
        %1050 = vmatprep.subr.bf16.mxu0 %v778
        %1051 = vmatpush1.bf16.msra.mxu0 %v777
        %1052 = vmatprep.subr.bf16.mxu0 %v782
        %1053 = vmatpush1.bf16.msra.mxu0 %v781
        %1054 = vmatprep.subr.bf16.mxu0 %v786
        %1055 = vmatpush1.bf16.msra.mxu0 %v785
        %1056 = vmatprep.subr.bf16.mxu0 %v790
        %1057 = vmatpush1.bf16.msra.mxu0 %v789
        %1058 = vmatprep.subr.bf16.mxu0 %v794
        %1059 = vmatpush1.bf16.msra.mxu0 %v793
        %1060 = vmatprep.subr.bf16.mxu0 %v798
        %1061 = vmatpush1.bf16.msra.mxu0 %v797
        %1062 = vmatprep.subr.bf16.mxu0 %v802
        %1063 = vmatpush1.bf16.msra.mxu0 %v801
        %1064 = vmatprep.mubr.bf16.mxu0 %v981
        %1065 = vmatmul.mubr.bf16.gmra.mrb[0].mxu0 %v979
        %v1066 = vpop.f32.mrb[0].mxu0
        %v1067 = vadd.f32 %v1026, %v1066
        %v1068 = vpop.f32.mrb[0].mxu0
        %v1069 = vadd.f32 %v1028, %v1068
        %v1070 = vpop.f32.mrb[0].mxu0
        %v1071 = vpop.f32.mrb[0].mxu0
        %1072 = vdwg.mxu0
        %1073 = vmatprep.subr.bf16.mxu0 %v806
        %1074 = vmatpush1.bf16.msra.mxu0 %v805
        %1075 = vmatprep.subr.bf16.mxu0 %v810
        %1076 = vmatpush1.bf16.msra.mxu0 %v809
        %1077 = vmatprep.subr.bf16.mxu0 %v814
        %1078 = vmatpush1.bf16.msra.mxu0 %v813
        %1079 = vmatprep.subr.bf16.mxu0 %v818
        %1080 = vmatpush1.bf16.msra.mxu0 %v817
        %1081 = vmatprep.subr.bf16.mxu0 %v822
        %1082 = vmatpush1.bf16.msra.mxu0 %v821
        %1083 = vmatprep.subr.bf16.mxu0 %v826
        %1084 = vmatpush1.bf16.msra.mxu0 %v825
        %1085 = vmatprep.subr.bf16.mxu0 %v830
        %1086 = vmatpush1.bf16.msra.mxu0 %v829
        %1087 = vmatprep.subr.bf16.mxu0 %v834
        %1088 = vmatpush1.bf16.msra.mxu0 %v833
        %1089 = vmatprep.subr.bf16.mxu0 %v838
        %1090 = vmatpush1.bf16.msra.mxu0 %v837
        %1091 = vmatprep.subr.bf16.mxu0 %v842
        %1092 = vmatpush1.bf16.msra.mxu0 %v841
        %1093 = vmatprep.subr.bf16.mxu0 %v846
        %1094 = vmatpush1.bf16.msra.mxu0 %v845
        %1095 = vmatprep.subr.bf16.mxu0 %v850
        %1096 = vmatpush1.bf16.msra.mxu0 %v849
        %1097 = vmatprep.subr.bf16.mxu0 %v854
        %1098 = vmatpush1.bf16.msra.mxu0 %v853
        %1099 = vmatprep.subr.bf16.mxu0 %v858
        %1100 = vmatpush1.bf16.msra.mxu0 %v857
        %1101 = vmatprep.subr.bf16.mxu0 %v862
        %1102 = vmatpush1.bf16.msra.mxu0 %v861
        %1103 = vmatprep.subr.bf16.mxu0 %v866
        %1104 = vmatpush1.bf16.msra.mxu0 %v865
        %1105 = vmatprep.mubr.bf16.mxu0 %v978
        %1106 = vmatmul.mubr.bf16.gmra.mrb[0].mxu0 %v964
        %v1107 = vpop.f32.mrb[0].mxu0
        %v1108 = vadd.f32 %v1067, %v1107
        %v1109 = vpop.f32.mrb[0].mxu0
        %v1110 = vadd.f32 %v1069, %v1109
        %v1111 = vpop.f32.mrb[0].mxu0
        %v1112 = vpop.f32.mrb[0].mxu0
        %1113 = vdwg.mxu0
        %1114 = vmatprep.subr.bf16.mxu0 %v870
        %1115 = vmatpush1.bf16.msra.mxu0 %v869
        %1116 = vmatprep.subr.bf16.mxu0 %v874
        %1117 = vmatpush1.bf16.msra.mxu0 %v873
        %1118 = vmatprep.subr.bf16.mxu0 %v878
        %1119 = vmatpush1.bf16.msra.mxu0 %v877
        %1120 = vmatprep.subr.bf16.mxu0 %v882
        %1121 = vmatpush1.bf16.msra.mxu0 %v881
        %1122 = vmatprep.subr.bf16.mxu0 %v886
        %1123 = vmatpush1.bf16.msra.mxu0 %v885
        %1124 = vmatprep.subr.bf16.mxu0 %v890
        %1125 = vmatpush1.bf16.msra.mxu0 %v889
        %1126 = vmatprep.subr.bf16.mxu0 %v894
        %1127 = vmatpush1.bf16.msra.mxu0 %v893
        %1128 = vmatprep.subr.bf16.mxu0 %v898
        %1129 = vmatpush1.bf16.msra.mxu0 %v897
        %1130 = vmatprep.subr.bf16.mxu0 %v902
        %1131 = vmatpush1.bf16.msra.mxu0 %v901
        %1132 = vmatprep.subr.bf16.mxu0 %v906
        %1133 = vmatpush1.bf16.msra.mxu0 %v905
        %1134 = vmatprep.subr.bf16.mxu0 %v910
        %1135 = vmatpush1.bf16.msra.mxu0 %v909
        %1136 = vmatprep.subr.bf16.mxu0 %v914
        %1137 = vmatpush1.bf16.msra.mxu0 %v913
        %1138 = vmatprep.subr.bf16.mxu0 %v918
        %1139 = vmatpush1.bf16.msra.mxu0 %v917
        %1140 = vmatprep.subr.bf16.mxu0 %v922
        %1141 = vmatpush1.bf16.msra.mxu0 %v921
        %1142 = vmatprep.subr.bf16.mxu0 %v926
        %1143 = vmatpush1.bf16.msra.mxu0 %v925
        %1144 = vmatprep.subr.bf16.mxu0 %v930
        %1145 = vmatpush1.bf16.msra.mxu0 %v929
        %1146 = vmatprep.mubr.bf16.mxu0 %v982
        %1147 = vmatmul.mubr.bf16.gmra.mrb[0].mxu0 %v980
        %v1148 = vpop.f32.mrb[0].mxu0
        %v1149 = vadd.f32 %v1108, %v1148
        %v1150 = vpop.f32.mrb[0].mxu0
        %v1151 = vadd.f32 %v1110, %v1150
        %v1152 = vpop.f32.mrb[0].mxu0
        %v1153 = vpop.f32.mrb[0].mxu0
        %1154 = vdwg.mxu0
        %1155 = vmatprep.subr.bf16.mxu0 %v680
        %1156 = vmatpush1.bf16.msra.mxu0 %v679
        %1157 = vmatprep.subr.bf16.mxu0 %v684
        %1158 = vmatpush1.bf16.msra.mxu0 %v683
        %1159 = vmatprep.subr.bf16.mxu0 %v688
        %1160 = vmatpush1.bf16.msra.mxu0 %v687
        %1161 = vmatprep.subr.bf16.mxu0 %v692
        %1162 = vmatpush1.bf16.msra.mxu0 %v691
        %1163 = vmatprep.subr.bf16.mxu0 %v696
        %1164 = vmatpush1.bf16.msra.mxu0 %v695
        %1165 = vmatprep.subr.bf16.mxu0 %v700
        %1166 = vmatpush1.bf16.msra.mxu0 %v699
        %1167 = vmatprep.subr.bf16.mxu0 %v704
        %1168 = vmatpush1.bf16.msra.mxu0 %v703
        %1169 = vmatprep.subr.bf16.mxu0 %v708
        %1170 = vmatpush1.bf16.msra.mxu0 %v707
        %1171 = vmatprep.subr.bf16.mxu0 %v712
        %1172 = vmatpush1.bf16.msra.mxu0 %v711
        %1173 = vmatprep.subr.bf16.mxu0 %v716
        %1174 = vmatpush1.bf16.msra.mxu0 %v715
        %1175 = vmatprep.subr.bf16.mxu0 %v720
        %1176 = vmatpush1.bf16.msra.mxu0 %v719
        %1177 = vmatprep.subr.bf16.mxu0 %v724
        %1178 = vmatpush1.bf16.msra.mxu0 %v723
        %1179 = vmatprep.subr.bf16.mxu0 %v728
        %1180 = vmatpush1.bf16.msra.mxu0 %v727
        %1181 = vmatprep.subr.bf16.mxu0 %v732
        %1182 = vmatpush1.bf16.msra.mxu0 %v731
        %1183 = vmatprep.subr.bf16.mxu0 %v736
        %1184 = vmatpush1.bf16.msra.mxu0 %v735
        %1185 = vmatprep.subr.bf16.mxu0 %v740
        %1186 = vmatpush1.bf16.msra.mxu0 %v739
        %1187 = vmatprep.mubr.bf16.mxu0 %v971
        %1188 = vmatmul.mubr.bf16.gmra.mrb[0].mxu0 %v957
        %v1189 = vpop.f32.mrb[0].mxu0
        %v1190 = vadd.f32 0.0, %v1189
        %v1191 = vpop.f32.mrb[0].mxu0
        %v1192 = vadd.f32 0.0, %v1191
        %v1193 = vpop.f32.mrb[0].mxu0
        %v1194 = vpop.f32.mrb[0].mxu0
        %1195 = vdwg.mxu0
        %1196 = vmatprep.subr.bf16.mxu0 %v744
        %1197 = vmatpush1.bf16.msra.mxu0 %v743
        %1198 = vmatprep.subr.bf16.mxu0 %v748
        %1199 = vmatpush1.bf16.msra.mxu0 %v747
        %1200 = vmatprep.subr.bf16.mxu0 %v752
        %1201 = vmatpush1.bf16.msra.mxu0 %v751
        %1202 = vmatprep.subr.bf16.mxu0 %v756
        %1203 = vmatpush1.bf16.msra.mxu0 %v755
        %1204 = vmatprep.subr.bf16.mxu0 %v760
        %1205 = vmatpush1.bf16.msra.mxu0 %v759
        %1206 = vmatprep.subr.bf16.mxu0 %v764
        %1207 = vmatpush1.bf16.msra.mxu0 %v763
        %1208 = vmatprep.subr.bf16.mxu0 %v768
        %1209 = vmatpush1.bf16.msra.mxu0 %v767
        %1210 = vmatprep.subr.bf16.mxu0 %v772
        %1211 = vmatpush1.bf16.msra.mxu0 %v771
        %1212 = vmatprep.subr.bf16.mxu0 %v776
        %1213 = vmatpush1.bf16.msra.mxu0 %v775
        %1214 = vmatprep.subr.bf16.mxu0 %v780
        %1215 = vmatpush1.bf16.msra.mxu0 %v779
        %1216 = vmatprep.subr.bf16.mxu0 %v784
        %1217 = vmatpush1.bf16.msra.mxu0 %v783
        %1218 = vmatprep.subr.bf16.mxu0 %v788
        %1219 = vmatpush1.bf16.msra.mxu0 %v787
        %1220 = vmatprep.subr.bf16.mxu0 %v792
        %1221 = vmatpush1.bf16.msra.mxu0 %v791
        %1222 = vmatprep.subr.bf16.mxu0 %v796
        %1223 = vmatpush1.bf16.msra.mxu0 %v795
        %1224 = vmatprep.subr.bf16.mxu0 %v800
        %1225 = vmatpush1.bf16.msra.mxu0 %v799
        %1226 = vmatprep.subr.bf16.mxu0 %v804
        %1227 = vmatpush1.bf16.msra.mxu0 %v803
        %1228 = vmatprep.mubr.bf16.mxu0 %v981
        %1229 = vmatmul.mubr.bf16.gmra.mrb[0].mxu0 %v979
        %v1230 = vpop.f32.mrb[0].mxu0
        %v1231 = vadd.f32 %v1190, %v1230
        %v1232 = vpop.f32.mrb[0].mxu0
        %v1233 = vadd.f32 %v1192, %v1232
        %v1234 = vpop.f32.mrb[0].mxu0
        %v1235 = vpop.f32.mrb[0].mxu0
        %1236 = vdwg.mxu0
        %1237 = vmatprep.subr.bf16.mxu0 %v808
        %1238 = vmatpush1.bf16.msra.mxu0 %v807
        %1239 = vmatprep.subr.bf16.mxu0 %v812
        %1240 = vmatpush1.bf16.msra.mxu0 %v811
        %1241 = vmatprep.subr.bf16.mxu0 %v816
        %1242 = vmatpush1.bf16.msra.mxu0 %v815
        %1243 = vmatprep.subr.bf16.mxu0 %v820
        %1244 = vmatpush1.bf16.msra.mxu0 %v819
        %1245 = vmatprep.subr.bf16.mxu0 %v824
        %1246 = vmatpush1.bf16.msra.mxu0 %v823
        %1247 = vmatprep.subr.bf16.mxu0 %v828
        %1248 = vmatpush1.bf16.msra.mxu0 %v827
        %1249 = vmatprep.subr.bf16.mxu0 %v832
        %1250 = vmatpush1.bf16.msra.mxu0 %v831
        %1251 = vmatprep.subr.bf16.mxu0 %v836
        %1252 = vmatpush1.bf16.msra.mxu0 %v835
        %1253 = vmatprep.subr.bf16.mxu0 %v840
        %1254 = vmatpush1.bf16.msra.mxu0 %v839
        %1255 = vmatprep.subr.bf16.mxu0 %v844
        %1256 = vmatpush1.bf16.msra.mxu0 %v843
        %1257 = vmatprep.subr.bf16.mxu0 %v848
        %1258 = vmatpush1.bf16.msra.mxu0 %v847
        %1259 = vmatprep.subr.bf16.mxu0 %v852
        %1260 = vmatpush1.bf16.msra.mxu0 %v851
        %1261 = vmatprep.subr.bf16.mxu0 %v856
        %1262 = vmatpush1.bf16.msra.mxu0 %v855
        %1263 = vmatprep.subr.bf16.mxu0 %v860
        %1264 = vmatpush1.bf16.msra.mxu0 %v859
        %1265 = vmatprep.subr.bf16.mxu0 %v864
        %1266 = vmatpush1.bf16.msra.mxu0 %v863
        %1267 = vmatprep.subr.bf16.mxu0 %v868
        %1268 = vmatpush1.bf16.msra.mxu0 %v867
        %1269 = vmatprep.mubr.bf16.mxu0 %v978
        %1270 = vmatmul.mubr.bf16.gmra.mrb[0].mxu0 %v964
        %v1271 = vpop.f32.mrb[0].mxu0
        %v1272 = vadd.f32 %v1231, %v1271
        %v1273 = vpop.f32.mrb[0].mxu0
        %v1274 = vadd.f32 %v1233, %v1273
        %v1275 = vpop.f32.mrb[0].mxu0
        %v1276 = vpop.f32.mrb[0].mxu0
        %1277 = vdwg.mxu0
        %1278 = vmatprep.subr.bf16.mxu0 %v872
        %1279 = vmatpush1.bf16.msra.mxu0 %v871
        %1280 = vmatprep.subr.bf16.mxu0 %v876
        %1281 = vmatpush1.bf16.msra.mxu0 %v875
        %1282 = vmatprep.subr.bf16.mxu0 %v880
        %1283 = vmatpush1.bf16.msra.mxu0 %v879
        %1284 = vmatprep.subr.bf16.mxu0 %v884
        %1285 = vmatpush1.bf16.msra.mxu0 %v883
        %1286 = vmatprep.subr.bf16.mxu0 %v888
        %1287 = vmatpush1.bf16.msra.mxu0 %v887
        %1288 = vmatprep.subr.bf16.mxu0 %v892
        %1289 = vmatpush1.bf16.msra.mxu0 %v891
        %1290 = vmatprep.subr.bf16.mxu0 %v896
        %1291 = vmatpush1.bf16.msra.mxu0 %v895
        %1292 = vmatprep.subr.bf16.mxu0 %v900
        %1293 = vmatpush1.bf16.msra.mxu0 %v899
        %1294 = vmatprep.subr.bf16.mxu0 %v904
        %1295 = vmatpush1.bf16.msra.mxu0 %v903
        %1296 = vmatprep.subr.bf16.mxu0 %v908
        %1297 = vmatpush1.bf16.msra.mxu0 %v907
        %1298 = vmatprep.subr.bf16.mxu0 %v912
        %1299 = vmatpush1.bf16.msra.mxu0 %v911
        %1300 = vmatprep.subr.bf16.mxu0 %v916
        %1301 = vmatpush1.bf16.msra.mxu0 %v915
        %1302 = vmatprep.subr.bf16.mxu0 %v920
        %1303 = vmatpush1.bf16.msra.mxu0 %v919
        %1304 = vmatprep.subr.bf16.mxu0 %v924
        %1305 = vmatpush1.bf16.msra.mxu0 %v923
        %1306 = vmatprep.subr.bf16.mxu0 %v928
        %1307 = vmatpush1.bf16.msra.mxu0 %v927
        %1308 = vmatprep.subr.bf16.mxu0 %v932
        %1309 = vmatpush1.bf16.msra.mxu0 %v931
        %1310 = vmatprep.mubr.bf16.mxu0 %v982
        %1311 = vmatmul.mubr.bf16.gmra.mrb[0].mxu0 %v980
        %v1312 = vpop.f32.mrb[0].mxu0
        %v1313 = vadd.f32 %v1272, %v1312
        %v1314 = vpop.f32.mrb[0].mxu0
        %v1315 = vadd.f32 %v1274, %v1314
        %v1316 = vpop.f32.mrb[0].mxu0
        %v1317 = vpop.f32.mrb[0].mxu0
        %1318 = vdwg.mxu0
        %v1319 = vld [vmem:[%s524] sm:$0xf]
        %v1321 = vlaneseq
        %v1322 = vshrl.u32 %v1321, 7
        %v1323 = vsub.s32 0, %v1322
        %v1324 = vrot.slane %v1319, %v1323
        %v1325 = vlaneseq
        %v1326 = vshrl.u32 %v1325, 7
        %v1327 = vsub.s32 1, %v1326
        %v1328 = vrot.slane %v1319, %v1327
        %v1329 = vlaneseq
        %v1330 = vshrl.u32 %v1329, 7
        %v1331 = vsub.s32 2, %v1330
        %v1332 = vrot.slane %v1319, %v1331
        %v1333 = vlaneseq
        %v1334 = vshrl.u32 %v1333, 7
        %v1335 = vsub.s32 3, %v1334
        %v1336 = vrot.slane %v1319, %v1335
        %v1341 = vmul.f32 %v1149, %v1324
        %v1342 = vmul.f32 %v1151, %v1328
        %v1343 = vmul.f32 %v1313, %v1332
        %v1344 = vmul.f32 %v1315, %v1336
        %v1345 = vld [vmem:[%s528] sm:$0xf]
        %v1347 = vlaneseq
        %v1348 = vshrl.u32 %v1347, 7
        %v1349 = vsub.s32 0, %v1348
        %v1350 = vrot.slane %v1345, %v1349
        %v1351 = vlaneseq
        %v1352 = vshrl.u32 %v1351, 7
        %v1353 = vsub.s32 1, %v1352
        %v1354 = vrot.slane %v1345, %v1353
        %v1355 = vlaneseq
        %v1356 = vshrl.u32 %v1355, 7
        %v1357 = vsub.s32 2, %v1356
        %v1358 = vrot.slane %v1345, %v1357
        %v1359 = vlaneseq
        %v1360 = vshrl.u32 %v1359, 7
        %v1361 = vsub.s32 3, %v1360
        %v1362 = vrot.slane %v1345, %v1361
        %v1367 = vadd.f32 %v1341, %v1350
        %v1368 = vadd.f32 %v1342, %v1354
        %v1369 = vadd.f32 %v1343, %v1358
        %v1370 = vadd.f32 %v1344, %v1362
        %v1371 = vmax.f32 %v1367, 0.0
        %v1372 = vmax.f32 %v1368, 0.0
        %v1373 = vmax.f32 %v1369, 0.0
        %v1374 = vmax.f32 %v1370, 0.0
        %v1375 = vpack.c.bf16 %v1371, %v1371
        %v1376 = vpack.c.bf16 %v1372, %v1372
        %v1377 = vpack.c.bf16 %v1373, %v1373
        %v1378 = vpack.c.bf16 %v1374, %v1374
        %v1379 = vld [vmem:[%s438] sm:$0xff]
        %v1380 = vld [vmem:[%s438 + $0x8] sm:$0xff]
        %v1381 = vld [vmem:[%s438 + $0x10] sm:$0xff]
        %v1382 = vld [vmem:[%s438 + $0x18] sm:$0xff]
        %v1383 = vld [vmem:[%s438 + $0x20] sm:$0xff]
        %v1384 = vld [vmem:[%s438 + $0x28] sm:$0xff]
        %v1385 = vld [vmem:[%s438 + $0x30] sm:$0xff]
        %v1386 = vld [vmem:[%s438 + $0x38] sm:$0xff]
        %v1387 = vld [vmem:[%s438 + $0x40] sm:$0xff]
        %v1388 = vld [vmem:[%s438 + $0x48] sm:$0xff]
        %v1389 = vld [vmem:[%s438 + $0x50] sm:$0xff]
        %v1390 = vld [vmem:[%s438 + $0x58] sm:$0xff]
        %v1391 = vld [vmem:[%s438 + $0x60] sm:$0xff]
        %v1392 = vld [vmem:[%s438 + $0x68] sm:$0xff]
        %v1393 = vld [vmem:[%s438 + $0x70] sm:$0xff]
        %v1394 = vld [vmem:[%s438 + $0x78] sm:$0xff]
        %v1395 = vld [vmem:[%s438 + $0x80] sm:$0xff]
        %v1396 = vld [vmem:[%s438 + $0x88] sm:$0xff]
        %v1397 = vld [vmem:[%s438 + $0x90] sm:$0xff]
        %v1398 = vld [vmem:[%s438 + $0x98] sm:$0xff]
        %v1399 = vld [vmem:[%s438 + $0xa0] sm:$0xff]
        %v1400 = vld [vmem:[%s438 + $0xa8] sm:$0xff]
        %v1401 = vld [vmem:[%s438 + $0xb0] sm:$0xff]
        %v1402 = vld [vmem:[%s438 + $0xb8] sm:$0xff]
        %v1403 = vld [vmem:[%s438 + $0xc0] sm:$0xff]
        %v1404 = vld [vmem:[%s438 + $0xc8] sm:$0xff]
        %v1405 = vld [vmem:[%s438 + $0xd0] sm:$0xff]
        %v1406 = vld [vmem:[%s438 + $0xd8] sm:$0xff]
        %v1407 = vld [vmem:[%s438 + $0xe0] sm:$0xff]
        %v1408 = vld [vmem:[%s438 + $0xe8] sm:$0xff]
        %v1409 = vld [vmem:[%s438 + $0xf0] sm:$0xff]
        %v1410 = vld [vmem:[%s438 + $0xf8] sm:$0xff]
        %v1411 = vunpack.c.l.s8.bf16 %v1379
        %v1412 = vunpack.c.l.s8.bf16 %v1380
        %v1413 = vunpack.c.h.s8.bf16 %v1379
        %v1414 = vunpack.c.h.s8.bf16 %v1380
        %v1415 = vunpack.c.l.s8.bf16 %v1381
        %v1416 = vunpack.c.l.s8.bf16 %v1382
        %v1417 = vunpack.c.h.s8.bf16 %v1381
        %v1418 = vunpack.c.h.s8.bf16 %v1382
        %v1419 = vunpack.c.l.s8.bf16 %v1383
        %v1420 = vunpack.c.l.s8.bf16 %v1384
        %v1421 = vunpack.c.h.s8.bf16 %v1383
        %v1422 = vunpack.c.h.s8.bf16 %v1384
        %v1423 = vunpack.c.l.s8.bf16 %v1385
        %v1424 = vunpack.c.l.s8.bf16 %v1386
        %v1425 = vunpack.c.h.s8.bf16 %v1385
        %v1426 = vunpack.c.h.s8.bf16 %v1386
        %v1427 = vunpack.c.l.s8.bf16 %v1387
        %v1428 = vunpack.c.l.s8.bf16 %v1388
        %v1429 = vunpack.c.h.s8.bf16 %v1387
        %v1430 = vunpack.c.h.s8.bf16 %v1388
        %v1431 = vunpack.c.l.s8.bf16 %v1389
        %v1432 = vunpack.c.l.s8.bf16 %v1390
        %v1433 = vunpack.c.h.s8.bf16 %v1389
        %v1434 = vunpack.c.h.s8.bf16 %v1390
        %v1435 = vunpack.c.l.s8.bf16 %v1391
        %v1436 = vunpack.c.l.s8.bf16 %v1392
        %v1437 = vunpack.c.h.s8.bf16 %v1391
        %v1438 = vunpack.c.h.s8.bf16 %v1392
        %v1439 = vunpack.c.l.s8.bf16 %v1393
        %v1440 = vunpack.c.l.s8.bf16 %v1394
        %v1441 = vunpack.c.h.s8.bf16 %v1393
        %v1442 = vunpack.c.h.s8.bf16 %v1394
        %v1443 = vunpack.c.l.s8.bf16 %v1395
        %v1444 = vunpack.c.l.s8.bf16 %v1396
        %v1445 = vunpack.c.h.s8.bf16 %v1395
        %v1446 = vunpack.c.h.s8.bf16 %v1396
        %v1447 = vunpack.c.l.s8.bf16 %v1397
        %v1448 = vunpack.c.l.s8.bf16 %v1398
        %v1449 = vunpack.c.h.s8.bf16 %v1397
        %v1450 = vunpack.c.h.s8.bf16 %v1398
        %v1451 = vunpack.c.l.s8.bf16 %v1399
        %v1452 = vunpack.c.l.s8.bf16 %v1400
        %v1453 = vunpack.c.h.s8.bf16 %v1399
        %v1454 = vunpack.c.h.s8.bf16 %v1400
        %v1455 = vunpack.c.l.s8.bf16 %v1401
        %v1456 = vunpack.c.l.s8.bf16 %v1402
        %v1457 = vunpack.c.h.s8.bf16 %v1401
        %v1458 = vunpack.c.h.s8.bf16 %v1402
        %v1459 = vunpack.c.l.s8.bf16 %v1403
        %v1460 = vunpack.c.l.s8.bf16 %v1404
        %v1461 = vunpack.c.h.s8.bf16 %v1403
        %v1462 = vunpack.c.h.s8.bf16 %v1404
        %v1463 = vunpack.c.l.s8.bf16 %v1405
        %v1464 = vunpack.c.l.s8.bf16 %v1406
        %v1465 = vunpack.c.h.s8.bf16 %v1405
        %v1466 = vunpack.c.h.s8.bf16 %v1406
        %v1467 = vunpack.c.l.s8.bf16 %v1407
        %v1468 = vunpack.c.l.s8.bf16 %v1408
        %v1469 = vunpack.c.h.s8.bf16 %v1407
        %v1470 = vunpack.c.h.s8.bf16 %v1408
        %v1471 = vunpack.c.l.s8.bf16 %v1409
        %v1472 = vunpack.c.l.s8.bf16 %v1410
        %v1473 = vunpack.c.h.s8.bf16 %v1409
        %v1474 = vunpack.c.h.s8.bf16 %v1410
        %1475 = vmatprep.subr.bf16.mxu0 %v1412
        %1476 = vmatpush1.bf16.msra.mxu0 %v1411
        %1477 = vmatprep.subr.bf16.mxu0 %v1414
        %1478 = vmatpush1.bf16.msra.mxu0 %v1413
        %1479 = vmatprep.subr.bf16.mxu0 %v1416
        %1480 = vmatpush1.bf16.msra.mxu0 %v1415
        %1481 = vmatprep.subr.bf16.mxu0 %v1418
        %1482 = vmatpush1.bf16.msra.mxu0 %v1417
        %1483 = vmatprep.subr.bf16.mxu0 %v1420
        %1484 = vmatpush1.bf16.msra.mxu0 %v1419
        %1485 = vmatprep.subr.bf16.mxu0 %v1422
        %1486 = vmatpush1.bf16.msra.mxu0 %v1421
        %1487 = vmatprep.subr.bf16.mxu0 %v1424
        %1488 = vmatpush1.bf16.msra.mxu0 %v1423
        %1489 = vmatprep.subr.bf16.mxu0 %v1426
        %1490 = vmatpush1.bf16.msra.mxu0 %v1425
        %1491 = vmatprep.subr.bf16.mxu0 %v1428
        %1492 = vmatpush1.bf16.msra.mxu0 %v1427
        %1493 = vmatprep.subr.bf16.mxu0 %v1430
        %1494 = vmatpush1.bf16.msra.mxu0 %v1429
        %1495 = vmatprep.subr.bf16.mxu0 %v1432
        %1496 = vmatpush1.bf16.msra.mxu0 %v1431
        %1497 = vmatprep.subr.bf16.mxu0 %v1434
        %1498 = vmatpush1.bf16.msra.mxu0 %v1433
        %1499 = vmatprep.subr.bf16.mxu0 %v1436
        %1500 = vmatpush1.bf16.msra.mxu0 %v1435
        %1501 = vmatprep.subr.bf16.mxu0 %v1438
        %1502 = vmatpush1.bf16.msra.mxu0 %v1437
        %1503 = vmatprep.subr.bf16.mxu0 %v1440
        %1504 = vmatpush1.bf16.msra.mxu0 %v1439
        %1505 = vmatprep.subr.bf16.mxu0 %v1442
        %1506 = vmatpush1.bf16.msra.mxu0 %v1441
        %1507 = vmatprep.mubr.bf16.mxu0 %v1376
        %1508 = vmatmul.mubr.bf16.gmra.mrb[0].mxu0 %v1375
        %v1509 = vpop.f32.mrb[0].mxu0
        %v1510 = vadd.f32 0.0, %v1509
        %v1511 = vpop.f32.mrb[0].mxu0
        %v1512 = vadd.f32 0.0, %v1511
        %v1513 = vpop.f32.mrb[0].mxu0
        %v1514 = vpop.f32.mrb[0].mxu0
        %1515 = vdwg.mxu0
        %1516 = vmatprep.subr.bf16.mxu0 %v1444
        %1517 = vmatpush1.bf16.msra.mxu0 %v1443
        %1518 = vmatprep.subr.bf16.mxu0 %v1446
        %1519 = vmatpush1.bf16.msra.mxu0 %v1445
        %1520 = vmatprep.subr.bf16.mxu0 %v1448
        %1521 = vmatpush1.bf16.msra.mxu0 %v1447
        %1522 = vmatprep.subr.bf16.mxu0 %v1450
        %1523 = vmatpush1.bf16.msra.mxu0 %v1449
        %1524 = vmatprep.subr.bf16.mxu0 %v1452
        %1525 = vmatpush1.bf16.msra.mxu0 %v1451
        %1526 = vmatprep.subr.bf16.mxu0 %v1454
        %1527 = vmatpush1.bf16.msra.mxu0 %v1453
        %1528 = vmatprep.subr.bf16.mxu0 %v1456
        %1529 = vmatpush1.bf16.msra.mxu0 %v1455
        %1530 = vmatprep.subr.bf16.mxu0 %v1458
        %1531 = vmatpush1.bf16.msra.mxu0 %v1457
        %1532 = vmatprep.subr.bf16.mxu0 %v1460
        %1533 = vmatpush1.bf16.msra.mxu0 %v1459
        %1534 = vmatprep.subr.bf16.mxu0 %v1462
        %1535 = vmatpush1.bf16.msra.mxu0 %v1461
        %1536 = vmatprep.subr.bf16.mxu0 %v1464
        %1537 = vmatpush1.bf16.msra.mxu0 %v1463
        %1538 = vmatprep.subr.bf16.mxu0 %v1466
        %1539 = vmatpush1.bf16.msra.mxu0 %v1465
        %1540 = vmatprep.subr.bf16.mxu0 %v1468
        %1541 = vmatpush1.bf16.msra.mxu0 %v1467
        %1542 = vmatprep.subr.bf16.mxu0 %v1470
        %1543 = vmatpush1.bf16.msra.mxu0 %v1469
        %1544 = vmatprep.subr.bf16.mxu0 %v1472
        %1545 = vmatpush1.bf16.msra.mxu0 %v1471
        %1546 = vmatprep.subr.bf16.mxu0 %v1474
        %1547 = vmatpush1.bf16.msra.mxu0 %v1473
        %1548 = vmatprep.mubr.bf16.mxu0 %v1378
        %1549 = vmatmul.mubr.bf16.gmra.mrb[0].mxu0 %v1377
        %v1550 = vpop.f32.mrb[0].mxu0
        %v1551 = vadd.f32 %v1510, %v1550
        %v1552 = vpop.f32.mrb[0].mxu0
        %v1553 = vadd.f32 %v1512, %v1552
        %v1554 = vpop.f32.mrb[0].mxu0
        %v1555 = vpop.f32.mrb[0].mxu0
        %1556 = vdwg.mxu0
        %v1557 = vld [vmem:[%s532] sm:$0x3]
        %v1559 = vlaneseq
        %v1560 = vshrl.u32 %v1559, 7
        %v1561 = vsub.s32 0, %v1560
        %v1562 = vrot.slane %v1557, %v1561
        %v1563 = vlaneseq
        %v1564 = vshrl.u32 %v1563, 7
        %v1565 = vsub.s32 1, %v1564
        %v1566 = vrot.slane %v1557, %v1565
        %v1569 = vmul.f32 %v1551, %v1562
        %v1570 = vmul.f32 %v1553, %v1566
        %v1571 = vld [vmem:[%s536] sm:$0x3]
        %v1573 = vlaneseq
        %v1574 = vshrl.u32 %v1573, 7
        %v1575 = vsub.s32 0, %v1574
        %v1576 = vrot.slane %v1571, %v1575
        %v1577 = vlaneseq
        %v1578 = vshrl.u32 %v1577, 7
        %v1579 = vsub.s32 1, %v1578
        %v1580 = vrot.slane %v1571, %v1579
        %v1583 = vadd.f32 %v1569, %v1576
        %v1584 = vadd.f32 %v1570, %v1580
        %v1585 = vmax.f32 %v1583, 0.0
        %v1586 = vmax.f32 %v1584, 0.0
        %v1587 = vpack.c.bf16 %v1585, %v1585
        %v1588 = vpack.c.bf16 %v1586, %v1586
        %v1589 = vld [vmem:[%s447] sm:$0xf]
        %v1590 = vld [vmem:[%s447 + $0x4] sm:$0xf]
        %v1591 = vld [vmem:[%s447 + $0x8] sm:$0xf]
        %v1592 = vld [vmem:[%s447 + $0xc] sm:$0xf]
        %v1593 = vld [vmem:[%s447 + $0x10] sm:$0xf]
        %v1594 = vld [vmem:[%s447 + $0x14] sm:$0xf]
        %v1595 = vld [vmem:[%s447 + $0x18] sm:$0xf]
        %v1596 = vld [vmem:[%s447 + $0x1c] sm:$0xf]
        %v1597 = vld [vmem:[%s447 + $0x20] sm:$0xf]
        %v1598 = vld [vmem:[%s447 + $0x24] sm:$0xf]
        %v1599 = vld [vmem:[%s447 + $0x28] sm:$0xf]
        %v1600 = vld [vmem:[%s447 + $0x2c] sm:$0xf]
        %v1601 = vld [vmem:[%s447 + $0x30] sm:$0xf]
        %v1602 = vld [vmem:[%s447 + $0x34] sm:$0xf]
        %v1603 = vld [vmem:[%s447 + $0x38] sm:$0xf]
        %v1604 = vld [vmem:[%s447 + $0x3c] sm:$0xf]
        %v1605 = vld [vmem:[%s447 + $0x40] sm:$0xf]
        %v1606 = vld [vmem:[%s447 + $0x44] sm:$0xf]
        %v1607 = vld [vmem:[%s447 + $0x48] sm:$0xf]
        %v1608 = vld [vmem:[%s447 + $0x4c] sm:$0xf]
        %v1609 = vld [vmem:[%s447 + $0x50] sm:$0xf]
        %v1610 = vld [vmem:[%s447 + $0x54] sm:$0xf]
        %v1611 = vld [vmem:[%s447 + $0x58] sm:$0xf]
        %v1612 = vld [vmem:[%s447 + $0x5c] sm:$0xf]
        %v1613 = vld [vmem:[%s447 + $0x60] sm:$0xf]
        %v1614 = vld [vmem:[%s447 + $0x64] sm:$0xf]
        %v1615 = vld [vmem:[%s447 + $0x68] sm:$0xf]
        %v1616 = vld [vmem:[%s447 + $0x6c] sm:$0xf]
        %v1617 = vld [vmem:[%s447 + $0x70] sm:$0xf]
        %v1618 = vld [vmem:[%s447 + $0x74] sm:$0xf]
        %v1619 = vld [vmem:[%s447 + $0x78] sm:$0xf]
        %v1620 = vld [vmem:[%s447 + $0x7c] sm:$0xf]
        %v1621 = vld [vmem:[%s539] sm:$0x1]
        %v1623 = vlaneseq
        %v1624 = vshrl.u32 %v1623, 7
        %v1625 = vsub.s32 0, %v1624
        %v1626 = vrot.slane %v1621, %v1625
        %v1660 = vunpack.c.l.b16 %v1589
        %v1661 = vunpack.c.l.b16 %v1590
        %v1662 = vunpack.c.l.b16 %v1591
        %v1663 = vunpack.c.l.b16 %v1592
        %v1664 = vunpack.c.l.b16 %v1593
        %v1665 = vunpack.c.l.b16 %v1594
        %v1666 = vunpack.c.l.b16 %v1595
        %v1667 = vunpack.c.l.b16 %v1596
        %v1668 = vunpack.c.l.b16 %v1597
        %v1669 = vunpack.c.l.b16 %v1598
        %v1670 = vunpack.c.l.b16 %v1599
        %v1671 = vunpack.c.l.b16 %v1600
        %v1672 = vunpack.c.l.b16 %v1601
        %v1673 = vunpack.c.l.b16 %v1602
        %v1674 = vunpack.c.l.b16 %v1603
        %v1675 = vunpack.c.l.b16 %v1604
        %v1676 = vunpack.c.l.b16 %v1605
        %v1677 = vunpack.c.l.b16 %v1606
        %v1678 = vunpack.c.l.b16 %v1607
        %v1679 = vunpack.c.l.b16 %v1608
        %v1680 = vunpack.c.l.b16 %v1609
        %v1681 = vunpack.c.l.b16 %v1610
        %v1682 = vunpack.c.l.b16 %v1611
        %v1683 = vunpack.c.l.b16 %v1612
        %v1684 = vunpack.c.l.b16 %v1613
        %v1685 = vunpack.c.l.b16 %v1614
        %v1686 = vunpack.c.l.b16 %v1615
        %v1687 = vunpack.c.l.b16 %v1616
        %v1688 = vunpack.c.l.b16 %v1617
        %v1689 = vunpack.c.l.b16 %v1618
        %v1690 = vunpack.c.l.b16 %v1619
        %v1691 = vunpack.c.l.b16 %v1620
        %v1692 = vpack.c.b16 %v1661, %v1660
        %v1693 = vpack.c.b16 %v1663, %v1662
        %v1694 = vpack.c.b16 %v1665, %v1664
        %v1695 = vpack.c.b16 %v1667, %v1666
        %v1696 = vpack.c.b16 %v1669, %v1668
        %v1697 = vpack.c.b16 %v1671, %v1670
        %v1698 = vpack.c.b16 %v1673, %v1672
        %v1699 = vpack.c.b16 %v1675, %v1674
        %v1700 = vpack.c.b16 %v1677, %v1676
        %v1701 = vpack.c.b16 %v1679, %v1678
        %v1702 = vpack.c.b16 %v1681, %v1680
        %v1703 = vpack.c.b16 %v1683, %v1682
        %v1704 = vpack.c.b16 %v1685, %v1684
        %v1705 = vpack.c.b16 %v1687, %v1686
        %v1706 = vpack.c.b16 %v1689, %v1688
        %v1707 = vpack.c.b16 %v1691, %v1690
        %1724 = vmatprep.subr.bf16.mxu0 0
        %1725 = vmatpush1.bf16.msra.mxu0 %v1692
        %1726 = vmatprep.subr.bf16.mxu0 0
        %1727 = vmatpush1.bf16.msra.mxu0 %v1693
        %1728 = vmatprep.subr.bf16.mxu0 0
        %1729 = vmatpush1.bf16.msra.mxu0 %v1694
        %1730 = vmatprep.subr.bf16.mxu0 0
        %1731 = vmatpush1.bf16.msra.mxu0 %v1695
        %1732 = vmatprep.subr.bf16.mxu0 0
        %1733 = vmatpush1.bf16.msra.mxu0 %v1696
        %1734 = vmatprep.subr.bf16.mxu0 0
        %1735 = vmatpush1.bf16.msra.mxu0 %v1697
        %1736 = vmatprep.subr.bf16.mxu0 0
        %1737 = vmatpush1.bf16.msra.mxu0 %v1698
        %1738 = vmatprep.subr.bf16.mxu0 0
        %1739 = vmatpush1.bf16.msra.mxu0 %v1699
        %1740 = vmatprep.subr.bf16.mxu0 0
        %1741 = vmatpush1.bf16.msra.mxu0 %v1700
        %1742 = vmatprep.subr.bf16.mxu0 0
        %1743 = vmatpush1.bf16.msra.mxu0 %v1701
        %1744 = vmatprep.subr.bf16.mxu0 0
        %1745 = vmatpush1.bf16.msra.mxu0 %v1702
        %1746 = vmatprep.subr.bf16.mxu0 0
        %1747 = vmatpush1.bf16.msra.mxu0 %v1703
        %1748 = vmatprep.subr.bf16.mxu0 0
        %1749 = vmatpush1.bf16.msra.mxu0 %v1704
        %1750 = vmatprep.subr.bf16.mxu0 0
        %1751 = vmatpush1.bf16.msra.mxu0 %v1705
        %1752 = vmatprep.subr.bf16.mxu0 0
        %1753 = vmatpush1.bf16.msra.mxu0 %v1706
        %1754 = vmatprep.subr.bf16.mxu0 0
        %1755 = vmatpush1.bf16.msra.mxu0 %v1707
        %1756 = vmatprep.mubr.bf16.mxu0 %v1588
        %1757 = vmatmul.mubr.bf16.gmra.mrb[0].mxu0 %v1587
        %v1758 = vpop.f32.mrb[0].mxu0
        %v1759 = vadd.f32 %v1626, %v1758
        %v1760 = vpop.f32.mrb[0].mxu0
        %v1761 = vpop.f32.mrb[0].mxu0
        %v1762 = vpop.f32.mrb[0].mxu0
        %1763 = vdwg.mxu0
        %vm1764 = vcmask 1041408
        %v1765 = vsel %vm1764, %v1759, -inf
        %1766 = vmax.xlane.f32.xlu0 %v1765
        %v1767 = vpop.xlane.xlu0 %1766
        %v1768 = vsub.f32 %v1759, %v1767
        %v1769 = vmul.f32 %v1768, 1.442695
        %v1770 = vpow.pop %v1769
        %v1771 = vsel %vm1764, %v1770, 0.0
        %1772 = vadd.xlane.f32.xlu0 %v1771
        %v1773 = vpop.xlane.xlu0 %1772
        %v1774 = vlog2.pop %v1773
        %v1775 = vmul.f32 %v1774, 0.6931472
        %v1776 = vsub.f32 %v1768, %v1775
        %1777 = vst [vmem:[%s546] sm:$0x3] %v1776
        %p1778 = scmp.lt.s32.totalorder %s30, 1
        %s1779 = scalar_select %p1778, %s30, 1
        %p1780 = scmp.lt.s32.totalorder %s31, 0
        %s1781 = scalar_select %p1780, %s31, 0
        %s1782 = sadd.s32 %s1781, %s1779
        %s1783 = smul.addr %s1782, 2
        %s1784 = scalar_lea.vmem %s9, %s1783
        // Predicated region
        $region69: #{point_conv_lwf_forward.1} parent=55 // pred_check
          %p1785 = pneg %p292
        $region70: #{point_conv_lwf_forward.1} parent=55 // pred_check_branch
          %1787 = sbr.rel (%p1785) target = $region72
        $region71: #{point_conv_lwf_forward.1} parent=55 // pred_region
          _
        $region72: #{point_conv_lwf_forward.1} parent=55 // pred_fallthru
          _
      $region56: #{point_conv_lwf_forward.1} parent=5 // pred_fallthru
        _
      %p1788 = scmp.le.s32.totalorder 2, %s21
      // Predicated region
      $region73: #{point_conv_lwf_forward.1} parent=5 // pred_check
        %p1789 = pneg %p1788
      $region74: #{point_conv_lwf_forward.1} parent=5 // pred_check_branch
        %1791 = sbr.rel (%p1789) target = $region76
      $region75: #{point_conv_lwf_forward.1} parent=5 // pred_region
        %s1792 = ssub.s32 %s21, 2
        // Predicated region
        $region77: #{point_conv_lwf_forward.1} parent=75 // pred_check
          %p1793 = pneg %p298
        $region78: #{point_conv_lwf_forward.1} parent=75 // pred_check_branch
          %1795 = sbr.rel (%p1793) target = $region80
        $region79: #{point_conv_lwf_forward.1} parent=75 // pred_region
          %p1796 = scmp.lt.s32.totalorder %s32, 1
          %s1797 = scalar_select %p1796, %s32, 1
          %p1798 = scmp.lt.s32.totalorder %s33, 0
          %s1799 = scalar_select %p1798, %s33, 0
          %s1800 = sadd.s32 %s1799, %s1797
          %s1801 = smul.addr %s1800, 2
          %s1802 = scalar_lea.vmem %s9, %s1801
        $region80: #{point_conv_lwf_forward.1} parent=75 // pred_fallthru
          _
      $region76: #{point_conv_lwf_forward.1} parent=5 // pred_fallthru
        _
    $region6: #{point_conv_lwf_forward.1} parent=1 // loop_footer
      %s25 = sadd.s32 1, %s21
    $region7: #{point_conv_lwf_forward.1} parent=1 // loop_footer_branch
      %20 = sbr.rel target = $region3
    $region8: #{point_conv_lwf_forward.1} parent=1 // loop_exit
      _
    %1803 = vsyncpa [#allocation3], 1
    %s1804 = scalar_lea.sflag [#allocation3], 1
    %1805 = vsyncpa %s1804, 1
    %1806 = vsyncpa [#allocation5], 1
    %s1807 = scalar_lea.sflag [#allocation5], 1
    %1808 = vsyncpa %s1807, 1

</llo_original>
